<compile_context>
chip_gen: v5e
topology: v5e:2x2
jax: 0.10.0
libtpu: 0.0.40
codegen_flags: <defaults>
</compile_context>

<pallas_src>
import functools

import numpy as np
import jax
import jax.numpy as jnp
from jax import lax
from jax.experimental import pallas as pl
from jax.experimental.pallas import tpu as pltpu

BN_EPS = 1e-5


# ---------------------------------------------------------------------------
# Tap bookkeeping: a conv tap (kh, kw) with stride (sH, sW) reads phase image
# p = (kh % sH) * sW + (kw % sW) at intra-phase offset (dh, dw) = (kh//sH, kw//sW).
# ---------------------------------------------------------------------------
def _taps(kH, kW, sH, sW):
    return [((kh % sH) * sW + (kw % sW), kh // sH, kw // sW)
            for kh in range(kH) for kw in range(kW)]


def _fold_bn(gamma, beta, mean, var):
    s = gamma / jnp.sqrt(var + BN_EPS)
    return s, beta - mean * s


def _padded_vmem_bytes(shape, dtype):
    """Crude per-block VMEM footprint: pad lane dim to 128, sublane dim to 8."""
    s = list(shape)
    if len(s) >= 1:
        s[-1] = -(-s[-1] // 128) * 128
    if len(s) >= 2:
        s[-2] = -(-s[-2] // 8) * 8
    n = 1
    for d in s:
        n *= int(d)
    return n * jnp.dtype(dtype).itemsize


def _vmem_limit(block_bytes):
    """Double-buffered blocks + scratch headroom, clamped to a safe range."""
    need = 2 * int(block_bytes) + (8 << 20)
    return int(min(max(need, 16 << 20), 48 << 20))


def _row_tile(Q, target=1024):
    """Largest multiple-of-8 divisor of Q that is <= target (else Q itself)."""
    if Q <= target:
        return Q
    t = (target // 8) * 8
    while t >= 8:
        if Q % t == 0:
            return t
        t -= 8
    return Q


# ---------------------------------------------------------------------------
# Pallas kernels
# ---------------------------------------------------------------------------
def _pointwise_kernel(x_ref, w_ref, b_ref, a_ref, o_ref):
    """1x1 / stride-1 / pad-0 conv: (TQ, Cin) @ (Cin, Cout) on the MXU + bias + PReLU.

    x_ref : (TQ, Cin)   bf16
    w_ref : (Cin, Cout) bf16  (BN scale folded)
    b_ref : (1, Cout)   f32   folded BN bias
    a_ref : (1, Cout)   f32   PReLU slope
    o_ref : (TQ, Cout)  f32
    """
    y = jnp.dot(x_ref[...], w_ref[...], preferred_element_type=jnp.float32)
    y = y + b_ref[...]
    y = jnp.where(y > 0, y, a_ref[...] * y)
    o_ref[...] = y.astype(o_ref.dtype)


def _conv_mm_kernel(x_ref, w_ref, b_ref, a_ref, o_ref, *, taps, Ho, Wo, Cin, Hph):
    """groups == 1 kxk conv: per-tap accumulated MXU matmuls (no im2col concat).

    x_ref : (nPh*Hph, Wph, Cin)  bf16 padded, phase-split image
    w_ref : (T, Cin, Cout)       bf16 per-tap weights (BN scale folded)
    b_ref : (1, Cout)            f32 folded BN bias
    a_ref : (1, Cout)            f32 PReLU slope
    o_ref : (Ho*Wo, Cout)        f32
    """
    Q = Ho * Wo
    acc = None
    for t, (p, dh, dw) in enumerate(taps):        # static python loop, contiguous slices
        slab = x_ref[pl.ds(p * Hph + dh, Ho), pl.ds(dw, Wo), :]       # (Ho, Wo, Cin)
        part = jnp.dot(slab.reshape(Q, Cin), w_ref[t],
                       preferred_element_type=jnp.float32)            # (Q, Cout)
        acc = part if acc is None else acc + part
    y = acc + b_ref[...]
    y = jnp.where(y > 0, y, a_ref[...] * y)
    o_ref[...] = y.astype(o_ref.dtype)


def _conv_dw_kernel(x_ref, w_ref, b_ref, a_ref, o_ref, *, taps, Ho, Wo, C, Hph):
    """depthwise conv (groups == in_c == out_c): lane-dense VPU shift-and-add.

    x_ref : (nPh*Hph, Wph*C)  bf16, lane index = w*C + c
    w_ref : (T, Wo*C)         f32 per-tap per-channel weights (BN folded, tiled Wo x)
    b_ref : (1, Wo*C)         f32 folded BN bias (tiled)
    a_ref : (1, Wo*C)         f32 PReLU slope (tiled)
    o_ref : (Ho, Wo*C)        bf16
    """
    wv = w_ref[...]                                # load once; reuse across taps
    acc = jnp.zeros((Ho, Wo * C), jnp.float32)
    for t, (p, dh, dw) in enumerate(taps):         # static python loop, VPU only
        slab = x_ref[pl.ds(p * Hph + dh, Ho), pl.ds(dw * C, Wo * C)]
        acc = acc + slab.astype(jnp.float32) * wv[t:t + 1, :]
    y = acc + b_ref[...]
    y = jnp.where(y > 0, y, a_ref[...] * y)
    o_ref[...] = y.astype(o_ref.dtype)


# ---------------------------------------------------------------------------
# Wrapper glue (plain JAX): padding, optional phase split, BN folding.
# ---------------------------------------------------------------------------
def _pad_phase_split(x_nhwc, kH, kW, sH, sW, pH, pW, Ho, Wo, dtype):
    """Zero-pad and (only for stride > 1) space-to-depth phase split.

    Returns (x, Hph, Wph, nPh) with x of shape (N, nPh*Hph, Wph, C).
    For stride == 1 the phase split is the identity, so only the pad is done.
    """
    N, H, W, C = x_nhwc.shape
    Hph = Ho + (kH - 1) // sH
    Wph = Wo + (kW - 1) // sW
    if sH == 1 and sW == 1:
        x = jnp.pad(x_nhwc, ((0, 0), (pH, Hph - H - pH), (pW, Wph - W - pW), (0, 0)))
        return x.astype(dtype), Hph, Wph, 1
    Hp = max(H + 2 * pH, sH * Hph)                 # pad a touch extra if needed so
    Wp = max(W + 2 * pW, sW * Wph)                 # every phase image is full-size
    x = jnp.pad(x_nhwc, ((0, 0), (pH, Hp - H - pH), (pW, Wp - W - pW), (0, 0)))
    phases = [x[:, ph::sH, pw::sW, :][:, :Hph, :Wph, :]
              for ph in range(sH) for pw in range(sW)]
    xph = jnp.stack(phases, axis=1).reshape(N, sH * sW * Hph, Wph, C)
    return xph.astype(dtype), Hph, Wph, sH * sW


def init_conv_block_params(key, in_c, out_c, kernel=(3, 3), groups=1):
    ks = jax.random.split(key, 6)
    kH, kW = kernel
    return {
        'w': 0.3 * jax.random.normal(ks[0], (out_c, in_c // groups, kH, kW), jnp.float32),
        'bn_g': jax.random.uniform(ks[1], (out_c,), jnp.float32, 0.5, 1.5),
        'bn_b': 0.1 * jax.random.normal(ks[2], (out_c,), jnp.float32),
        'bn_m': 0.1 * jax.random.normal(ks[3], (out_c,), jnp.float32),
        'bn_v': jax.random.uniform(ks[4], (out_c,), jnp.float32, 0.5, 1.5),
        'prelu': jax.random.uniform(ks[5], (out_c,), jnp.float32, 0.1, 0.4),
    }


def conv_block_forward(x, params, *, kernel=(1, 1), stride=(1, 1),
                       padding=(0, 0), groups=1, layout="NCHW"):
    if layout == "NCHW":
        N, Cin, H, W = x.shape
        x_nhwc = jnp.transpose(x, (0, 2, 3, 1)).astype(jnp.float32)
    elif layout == "NHWC":
        N, H, W, Cin = x.shape
        x_nhwc = x.astype(jnp.float32)
    else:
        raise ValueError(f"unsupported layout {layout!r}")

    w = params['w']                               # (Cout, Cin//groups, kH, kW)
    Cout = w.shape[0]
    kH, kW = kernel
    sH, sW = stride
    pH, pW = padding
    Ho = (H + 2 * pH - kH) // sH + 1
    Wo = (W + 2 * pW - kW) // sW + 1
    Q = Ho * Wo
    taps = _taps(kH, kW, sH, sW)
    T = len(taps)

    s, b = _fold_bn(params['bn_g'], params['bn_b'], params['bn_m'], params['bn_v'])
    alpha = params['prelu'].astype(jnp.float32)
    brow = b.reshape(1, Cout).astype(jnp.float32)
    arow = alpha.reshape(1, Cout)

    # ---------------------------------------------------- 1x1 pointwise fast path
    if (groups == 1 and (kH, kW) == (1, 1) and (sH, sW) == (1, 1)
            and (pH, pW) == (0, 0)):
        xq = x_nhwc.reshape(N, Q, Cin).astype(jnp.bfloat16)      # no pad / no phase copy
        wmat = (w[:, :, 0, 0].T * s[None, :]).astype(jnp.bfloat16)   # (Cin, Cout)
        TQ = _row_tile(Q)
        nQ = Q // TQ
        blk = (_padded_vmem_bytes((TQ, Cin), jnp.bfloat16)
               + _padded_vmem_bytes((Cin, Cout), jnp.bfloat16)
               + 2 * _padded_vmem_bytes((1, Cout), jnp.float32)
               + 2 * _padded_vmem_bytes((TQ, Cout), jnp.float32))
        cost = pl.CostEstimate(
            flops=int(2 * N * Q * Cin * Cout), transcendentals=0,
            bytes_accessed=int(2 * xq.size + 4 * N * Q * Cout
                               + N * nQ * (2 * wmat.size + 8 * Cout)))
        out = pl.pallas_call(
            _pointwise_kernel,
            out_shape=jax.ShapeDtypeStruct((N, Q, Cout), jnp.float32),
            grid=(N, nQ),
            in_specs=[
                pl.BlockSpec((None, TQ, Cin), lambda n, q: (n, q, 0)),
                pl.BlockSpec((Cin, Cout), lambda n, q: (0, 0)),
                pl.BlockSpec((1, Cout), lambda n, q: (0, 0)),
                pl.BlockSpec((1, Cout), lambda n, q: (0, 0)),
            ],
            out_specs=pl.BlockSpec((None, TQ, Cout), lambda n, q: (n, q, 0)),
            compiler_params=pltpu.CompilerParams(
                dimension_semantics=("parallel", "parallel"),
                vmem_limit_bytes=_vmem_limit(blk)),
            cost_estimate=cost,
        )(xq, wmat, brow, arow)
        out = out.reshape(N, Ho, Wo, Cout)
        return out if layout == "NHWC" else out.transpose(0, 3, 1, 2)

    # ---------------------------------------------------- general groups == 1
    if groups == 1:
        xph, Hph, Wph, nPh = _pad_phase_split(
            x_nhwc, kH, kW, sH, sW, pH, pW, Ho, Wo, jnp.bfloat16)
        # Per-tap (Cin, Cout) weights with BN scale folded in; order matches _taps.
        wt = jnp.stack([w[:, :, kh, kw].T * s[None, :]
                        for kh in range(kH) for kw in range(kW)],
                       axis=0).astype(jnp.bfloat16)               # (T, Cin, Cout)
        # TODO(synk): pair taps (K = 2*Cin) when Cin == 64 to better fill the 256-deep
        #             v6e/v7x MXU, and add an Element-halo Ho-tile grid axis for
        #             >=112px feature maps on v7x (64 MiB VMEM / 2 TCs).
        kfn = functools.partial(_conv_mm_kernel, taps=taps,
                                Ho=Ho, Wo=Wo, Cin=Cin, Hph=Hph)
        blk = (_padded_vmem_bytes((nPh * Hph, Wph, Cin), jnp.bfloat16)
               + _padded_vmem_bytes((T, Cin, Cout), jnp.bfloat16)
               + 2 * _padded_vmem_bytes((1, Cout), jnp.float32)
               + 2 * _padded_vmem_bytes((Q, Cout), jnp.float32))
        cost = pl.CostEstimate(
            flops=int(2 * N * Q * T * Cin * Cout), transcendentals=0,
            bytes_accessed=int(2 * xph.size + 4 * N * Q * Cout
                               + N * (2 * wt.size + 8 * Cout)))
        out = pl.pallas_call(
            kfn,
            out_shape=jax.ShapeDtypeStruct((N, Q, Cout), jnp.float32),
            grid=(N,),
            in_specs=[
                pl.BlockSpec((None, nPh * Hph, Wph, Cin), lambda n: (n, 0, 0, 0)),
                pl.BlockSpec((T, Cin, Cout), lambda n: (0, 0, 0)),
                pl.BlockSpec((1, Cout), lambda n: (0, 0)),
                pl.BlockSpec((1, Cout), lambda n: (0, 0)),
            ],
            out_specs=pl.BlockSpec((None, Q, Cout), lambda n: (n, 0, 0)),
            compiler_params=pltpu.CompilerParams(
                dimension_semantics=("parallel",),
                vmem_limit_bytes=_vmem_limit(blk)),
            cost_estimate=cost,
        )(xph, wt, brow, arow)
        out = out.reshape(N, Ho, Wo, Cout)
        return out if layout == "NHWC" else out.transpose(0, 3, 1, 2)

    # ---------------------------------------------------- depthwise
    if groups == Cin and Cout == Cin:
        C = Cin
        xph, Hph, Wph, nPh = _pad_phase_split(
            x_nhwc, kH, kW, sH, sW, pH, pW, Ho, Wo, jnp.bfloat16)
        x2 = xph.reshape(N, nPh * Hph, Wph * C)                    # lane-dense slab
        wd = w[:, 0, :, :]                                         # (C, kH, kW)
        wrows = jnp.stack([jnp.tile(wd[:, kh, kw] * s, Wo)
                           for kh in range(kH) for kw in range(kW)],
                          axis=0).astype(jnp.float32)              # (T, Wo*C)
        bden = jnp.tile(b, Wo).reshape(1, Wo * C).astype(jnp.float32)
        aden = jnp.tile(alpha, Wo).reshape(1, Wo * C)
        kfn = functools.partial(_conv_dw_kernel, taps=taps,
                                Ho=Ho, Wo=Wo, C=C, Hph=Hph)
        blk = (_padded_vmem_bytes((nPh * Hph, Wph * C), jnp.bfloat16)
               + _padded_vmem_bytes((T, Wo * C), jnp.float32)
               + 2 * _padded_vmem_bytes((1, Wo * C), jnp.float32)
               + _padded_vmem_bytes((Ho, Wo * C), jnp.bfloat16)
               + _padded_vmem_bytes((Ho, Wo * C), jnp.float32))
        cost = pl.CostEstimate(
            flops=int(2 * N * Q * T * C), transcendentals=0,
            bytes_accessed=int(2 * x2.size + 2 * N * Ho * Wo * C
                               + N * (4 * wrows.size + 8 * Wo * C)))
        out = pl.pallas_call(
            kfn,
            out_shape=jax.ShapeDtypeStruct((N, Ho, Wo * C), jnp.bfloat16),
            grid=(N,),
            in_specs=[
                pl.BlockSpec((None, nPh * Hph, Wph * C), lambda n: (n, 0, 0)),
                pl.BlockSpec((T, Wo * C), lambda n: (0, 0)),
                pl.BlockSpec((1, Wo * C), lambda n: (0, 0)),
                pl.BlockSpec((1, Wo * C), lambda n: (0, 0)),
            ],
            out_specs=pl.BlockSpec((None, Ho, Wo * C), lambda n: (n, 0, 0)),
            compiler_params=pltpu.CompilerParams(
                dimension_semantics=("parallel",),
                vmem_limit_bytes=_vmem_limit(blk)),
            cost_estimate=cost,
        )(x2, wrows, bden, aden)
        out = out.astype(jnp.float32).reshape(N, Ho, Wo, C)
        return out if layout == "NHWC" else out.transpose(0, 3, 1, 2)

    # TODO(synk): general grouped conv (1 < groups < in_c) is never used by
    # MobileFaceNet's Conv_block and is not implemented here.
    raise NotImplementedError("groups must be 1 or equal to in_c (= out_c)")


# ---------------------------------------------------------------------------
# Pure-JAX reference (correctness check only)
# ---------------------------------------------------------------------------
def conv_block_reference(x, params, *, kernel=(1, 1), stride=(1, 1),
                         padding=(0, 0), groups=1):
    dn = ('NCHW', 'OIHW', 'NCHW')
    y = lax.conv_general_dilated(
        x.astype(jnp.float32), params['w'].astype(jnp.float32), stride,
        [(padding[0], padding[0]), (padding[1], padding[1])],
        dimension_numbers=dn, feature_group_count=groups,
        precision=lax.Precision.HIGHEST)
    s = params['bn_g'] / jnp.sqrt(params['bn_v'] + BN_EPS)
    b = params['bn_b'] - params['bn_m'] * s
    y = y * s[None, :, None, None] + b[None, :, None, None]
    a = params['prelu']
    return jnp.where(y > 0, y, a[None, :, None, None] * y)


if __name__ == "__main__":
    key = jax.random.PRNGKey(0)
    kx1, kp1, kx2, kp2, kx3, kp3 = jax.random.split(key, 6)

    # bf16 MXU inputs / bf16 activation I/O => relaxed tolerance vs. f32 reference.
    RTOL, ATOL = 3e-2, 6e-2

    # Config A: stem-style Conv_block(4, 8, kernel=(3,3), stride=(2,2), padding=(1,1)).
    xA = jax.random.normal(kx1, (2, 4, 16, 16), jnp.float32)
    pA = init_conv_block_params(kp1, 4, 8, kernel=(3, 3), groups=1)
    outA = jax.block_until_ready(conv_block_forward(
        xA, pA, kernel=(3, 3), stride=(2, 2), padding=(1, 1), groups=1))
    refA = conv_block_reference(xA, pA, kernel=(3, 3), stride=(2, 2),
                                padding=(1, 1), groups=1)
    assert outA.shape == (2, 8, 8, 8), outA.shape
    np.testing.assert_allclose(np.asarray(outA), np.asarray(refA), rtol=RTOL, atol=ATOL)

    # Config B: depthwise Conv_block(8, 8, kernel=(3,3), stride=(1,1), padding=(1,1), groups=8).
    xB = jax.random.normal(kx2, (2, 8, 16, 16), jnp.float32)
    pB = init_conv_block_params(kp2, 8, 8, kernel=(3, 3), groups=8)
    outB = jax.block_until_ready(conv_block_forward(
        xB, pB, kernel=(3, 3), stride=(1, 1), padding=(1, 1), groups=8))
    refB = conv_block_reference(xB, pB, kernel=(3, 3), stride=(1, 1),
                                padding=(1, 1), groups=8)
    np.testing.assert_allclose(np.asarray(outB), np.asarray(refB), rtol=RTOL, atol=ATOL)

    # Config C: 1x1 pointwise Conv_block(4, 16) with module defaults (fast path).
    xC = jax.random.normal(kx3, (2, 4, 16, 16), jnp.float32)
    pC = init_conv_block_params(kp3, 4, 16, kernel=(1, 1), groups=1)
    outC = jax.block_until_ready(conv_block_forward(xC, pC))
    refC = conv_block_reference(xC, pC)
    np.testing.assert_allclose(np.asarray(outC), np.asarray(refC), rtol=RTOL, atol=ATOL)

    # Config C again via the transpose-free NHWC interface.
    outC_nhwc = jax.block_until_ready(conv_block_forward(
        xC.transpose(0, 2, 3, 1), pC, layout="NHWC"))
    np.testing.assert_allclose(np.asarray(outC_nhwc),
                               np.asarray(refC.transpose(0, 2, 3, 1)),
                               rtol=RTOL, atol=ATOL)

    print("KERNEL_OK")
</pallas_src>

<mosaic_0001>
module attributes {stable_mosaic.version = 11 : i64} {
  func.func @_conv_mm_kernel(%arg0: i32, %arg1: memref<1x36x9x4xbf16, #tpu.memory_space<vmem>>, %arg2: memref<9x4x8xbf16, #tpu.memory_space<vmem>>, %arg3: memref<1x8xf32, #tpu.memory_space<vmem>>, %arg4: memref<1x8xf32, #tpu.memory_space<vmem>>, %arg5: memref<1x64x8xf32, #tpu.memory_space<vmem>>) attributes {dimension_semantics = [#tpu.dimension_semantics<parallel>], iteration_bounds = array<i64: 2>, scalar_prefetch = 0 : i64, scratch_operands = 0 : i64, tpu.core_type = #tpu.core_type<tc>, window_params = [{transform_indices = @transform_0, window_bounds = array<i64: 1, 36, 9, 4>}, {pipeline_mode = #tpu.pipeline_mode<synchronous>, transform_indices = @transform_1, window_bounds = array<i64: 9, 4, 8>}, {pipeline_mode = #tpu.pipeline_mode<synchronous>, transform_indices = @transform_2, window_bounds = array<i64: 1, 8>}, {pipeline_mode = #tpu.pipeline_mode<synchronous>, transform_indices = @transform_3, window_bounds = array<i64: 1, 8>}, {transform_indices = @transform_4, window_bounds = array<i64: 1, 64, 8>}]} {
    %c0 = arith.constant 0 : index
    %c0_0 = arith.constant 0 : index
    %c0_1 = arith.constant 0 : index
    %c0_2 = arith.constant 0 : index
    %0 = vector.load %arg1[%c0, %c0_0, %c0_1, %c0_2] : memref<1x36x9x4xbf16, #tpu.memory_space<vmem>>, vector<1x8x8x4xbf16>
    %1 = vector.shape_cast %0 : vector<1x8x8x4xbf16> to vector<8x8x4xbf16>
    %2 = vector.shape_cast %1 : vector<8x8x4xbf16> to vector<64x4xbf16>
    %c0_3 = arith.constant 0 : index
    %c0_4 = arith.constant 0 : index
    %c0_5 = arith.constant 0 : index
    %3 = vector.load %arg2[%c0_3, %c0_4, %c0_5] : memref<9x4x8xbf16, #tpu.memory_space<vmem>>, vector<1x4x8xbf16>
    %4 = vector.shape_cast %3 : vector<1x4x8xbf16> to vector<4x8xbf16>
    %cst = arith.constant dense<0.000000e+00> : vector<64x8xf32>
    %5 = tpu.matmul %2, %4, %cst {dimension_numbers = #tpu.dot_dimension_numbers<[1], [0], [0], [1], [0, 0, 1, 1], [], []>} : vector<64x4xbf16>, vector<4x8xbf16>, vector<64x8xf32> -> vector<64x8xf32>
    %c0_6 = arith.constant 0 : index
    %c9 = arith.constant 9 : index
    %c0_7 = arith.constant 0 : index
    %c0_8 = arith.constant 0 : index
    %6 = vector.load %arg1[%c0_6, %c9, %c0_7, %c0_8] : memref<1x36x9x4xbf16, #tpu.memory_space<vmem>>, vector<1x8x8x4xbf16>
    %7 = vector.shape_cast %6 : vector<1x8x8x4xbf16> to vector<8x8x4xbf16>
    %8 = vector.shape_cast %7 : vector<8x8x4xbf16> to vector<64x4xbf16>
    %c1 = arith.constant 1 : index
    %c0_9 = arith.constant 0 : index
    %c0_10 = arith.constant 0 : index
    %9 = vector.load %arg2[%c1, %c0_9, %c0_10] : memref<9x4x8xbf16, #tpu.memory_space<vmem>>, vector<1x4x8xbf16>
    %10 = vector.shape_cast %9 : vector<1x4x8xbf16> to vector<4x8xbf16>
    %cst_11 = arith.constant dense<0.000000e+00> : vector<64x8xf32>
    %11 = tpu.matmul %8, %10, %cst_11 {dimension_numbers = #tpu.dot_dimension_numbers<[1], [0], [0], [1], [0, 0, 1, 1], [], []>} : vector<64x4xbf16>, vector<4x8xbf16>, vector<64x8xf32> -> vector<64x8xf32>
    %12 = arith.addf %5, %11 : vector<64x8xf32>
    %c0_12 = arith.constant 0 : index
    %c0_13 = arith.constant 0 : index
    %c1_14 = arith.constant 1 : index
    %c0_15 = arith.constant 0 : index
    %13 = vector.load %arg1[%c0_12, %c0_13, %c1_14, %c0_15] : memref<1x36x9x4xbf16, #tpu.memory_space<vmem>>, vector<1x8x8x4xbf16>
    %14 = vector.shape_cast %13 : vector<1x8x8x4xbf16> to vector<8x8x4xbf16>
    %15 = vector.shape_cast %14 : vector<8x8x4xbf16> to vector<64x4xbf16>
    %c2 = arith.constant 2 : index
    %c0_16 = arith.constant 0 : index
    %c0_17 = arith.constant 0 : index
    %16 = vector.load %arg2[%c2, %c0_16, %c0_17] : memref<9x4x8xbf16, #tpu.memory_space<vmem>>, vector<1x4x8xbf16>
    %17 = vector.shape_cast %16 : vector<1x4x8xbf16> to vector<4x8xbf16>
    %cst_18 = arith.constant dense<0.000000e+00> : vector<64x8xf32>
    %18 = tpu.matmul %15, %17, %cst_18 {dimension_numbers = #tpu.dot_dimension_numbers<[1], [0], [0], [1], [0, 0, 1, 1], [], []>} : vector<64x4xbf16>, vector<4x8xbf16>, vector<64x8xf32> -> vector<64x8xf32>
    %19 = arith.addf %12, %18 : vector<64x8xf32>
    %c0_19 = arith.constant 0 : index
    %c18 = arith.constant 18 : index
    %c0_20 = arith.constant 0 : index
    %c0_21 = arith.constant 0 : index
    %20 = vector.load %arg1[%c0_19, %c18, %c0_20, %c0_21] : memref<1x36x9x4xbf16, #tpu.memory_space<vmem>>, vector<1x8x8x4xbf16>
    %21 = vector.shape_cast %20 : vector<1x8x8x4xbf16> to vector<8x8x4xbf16>
    %22 = vector.shape_cast %21 : vector<8x8x4xbf16> to vector<64x4xbf16>
    %c3 = arith.constant 3 : index
    %c0_22 = arith.constant 0 : index
    %c0_23 = arith.constant 0 : index
    %23 = vector.load %arg2[%c3, %c0_22, %c0_23] : memref<9x4x8xbf16, #tpu.memory_space<vmem>>, vector<1x4x8xbf16>
    %24 = vector.shape_cast %23 : vector<1x4x8xbf16> to vector<4x8xbf16>
    %cst_24 = arith.constant dense<0.000000e+00> : vector<64x8xf32>
    %25 = tpu.matmul %22, %24, %cst_24 {dimension_numbers = #tpu.dot_dimension_numbers<[1], [0], [0], [1], [0, 0, 1, 1], [], []>} : vector<64x4xbf16>, vector<4x8xbf16>, vector<64x8xf32> -> vector<64x8xf32>
    %26 = arith.addf %19, %25 : vector<64x8xf32>
    %c0_25 = arith.constant 0 : index
    %c27 = arith.constant 27 : index
    %c0_26 = arith.constant 0 : index
    %c0_27 = arith.constant 0 : index
    %27 = vector.load %arg1[%c0_25, %c27, %c0_26, %c0_27] : memref<1x36x9x4xbf16, #tpu.memory_space<vmem>>, vector<1x8x8x4xbf16>
    %28 = vector.shape_cast %27 : vector<1x8x8x4xbf16> to vector<8x8x4xbf16>
    %29 = vector.shape_cast %28 : vector<8x8x4xbf16> to vector<64x4xbf16>
    %c4 = arith.constant 4 : index
    %c0_28 = arith.constant 0 : index
    %c0_29 = arith.constant 0 : index
    %30 = vector.load %arg2[%c4, %c0_28, %c0_29] : memref<9x4x8xbf16, #tpu.memory_space<vmem>>, vector<1x4x8xbf16>
    %31 = vector.shape_cast %30 : vector<1x4x8xbf16> to vector<4x8xbf16>
    %cst_30 = arith.constant dense<0.000000e+00> : vector<64x8xf32>
    %32 = tpu.matmul %29, %31, %cst_30 {dimension_numbers = #tpu.dot_dimension_numbers<[1], [0], [0], [1], [0, 0, 1, 1], [], []>} : vector<64x4xbf16>, vector<4x8xbf16>, vector<64x8xf32> -> vector<64x8xf32>
    %33 = arith.addf %26, %32 : vector<64x8xf32>
    %c0_31 = arith.constant 0 : index
    %c18_32 = arith.constant 18 : index
    %c1_33 = arith.constant 1 : index
    %c0_34 = arith.constant 0 : index
    %34 = vector.load %arg1[%c0_31, %c18_32, %c1_33, %c0_34] : memref<1x36x9x4xbf16, #tpu.memory_space<vmem>>, vector<1x8x8x4xbf16>
    %35 = vector.shape_cast %34 : vector<1x8x8x4xbf16> to vector<8x8x4xbf16>
    %36 = vector.shape_cast %35 : vector<8x8x4xbf16> to vector<64x4xbf16>
    %c5 = arith.constant 5 : index
    %c0_35 = arith.constant 0 : index
    %c0_36 = arith.constant 0 : index
    %37 = vector.load %arg2[%c5, %c0_35, %c0_36] : memref<9x4x8xbf16, #tpu.memory_space<vmem>>, vector<1x4x8xbf16>
    %38 = vector.shape_cast %37 : vector<1x4x8xbf16> to vector<4x8xbf16>
    %cst_37 = arith.constant dense<0.000000e+00> : vector<64x8xf32>
    %39 = tpu.matmul %36, %38, %cst_37 {dimension_numbers = #tpu.dot_dimension_numbers<[1], [0], [0], [1], [0, 0, 1, 1], [], []>} : vector<64x4xbf16>, vector<4x8xbf16>, vector<64x8xf32> -> vector<64x8xf32>
    %40 = arith.addf %33, %39 : vector<64x8xf32>
    %c0_38 = arith.constant 0 : index
    %c1_39 = arith.constant 1 : index
    %c0_40 = arith.constant 0 : index
    %c0_41 = arith.constant 0 : index
    %41 = vector.load %arg1[%c0_38, %c1_39, %c0_40, %c0_41] : memref<1x36x9x4xbf16, #tpu.memory_space<vmem>>, vector<1x8x8x4xbf16>
    %42 = vector.shape_cast %41 : vector<1x8x8x4xbf16> to vector<8x8x4xbf16>
    %43 = vector.shape_cast %42 : vector<8x8x4xbf16> to vector<64x4xbf16>
    %c6 = arith.constant 6 : index
    %c0_42 = arith.constant 0 : index
    %c0_43 = arith.constant 0 : index
    %44 = vector.load %arg2[%c6, %c0_42, %c0_43] : memref<9x4x8xbf16, #tpu.memory_space<vmem>>, vector<1x4x8xbf16>
    %45 = vector.shape_cast %44 : vector<1x4x8xbf16> to vector<4x8xbf16>
    %cst_44 = arith.constant dense<0.000000e+00> : vector<64x8xf32>
    %46 = tpu.matmul %43, %45, %cst_44 {dimension_numbers = #tpu.dot_dimension_numbers<[1], [0], [0], [1], [0, 0, 1, 1], [], []>} : vector<64x4xbf16>, vector<4x8xbf16>, vector<64x8xf32> -> vector<64x8xf32>
    %47 = arith.addf %40, %46 : vector<64x8xf32>
    %c0_45 = arith.constant 0 : index
    %c10 = arith.constant 10 : index
    %c0_46 = arith.constant 0 : index
    %c0_47 = arith.constant 0 : index
    %48 = vector.load %arg1[%c0_45, %c10, %c0_46, %c0_47] : memref<1x36x9x4xbf16, #tpu.memory_space<vmem>>, vector<1x8x8x4xbf16>
    %49 = vector.shape_cast %48 : vector<1x8x8x4xbf16> to vector<8x8x4xbf16>
    %50 = vector.shape_cast %49 : vector<8x8x4xbf16> to vector<64x4xbf16>
    %c7 = arith.constant 7 : index
    %c0_48 = arith.constant 0 : index
    %c0_49 = arith.constant 0 : index
    %51 = vector.load %arg2[%c7, %c0_48, %c0_49] : memref<9x4x8xbf16, #tpu.memory_space<vmem>>, vector<1x4x8xbf16>
    %52 = vector.shape_cast %51 : vector<1x4x8xbf16> to vector<4x8xbf16>
    %cst_50 = arith.constant dense<0.000000e+00> : vector<64x8xf32>
    %53 = tpu.matmul %50, %52, %cst_50 {dimension_numbers = #tpu.dot_dimension_numbers<[1], [0], [0], [1], [0, 0, 1, 1], [], []>} : vector<64x4xbf16>, vector<4x8xbf16>, vector<64x8xf32> -> vector<64x8xf32>
    %54 = arith.addf %47, %53 : vector<64x8xf32>
    %c0_51 = arith.constant 0 : index
    %c1_52 = arith.constant 1 : index
    %c1_53 = arith.constant 1 : index
    %c0_54 = arith.constant 0 : index
    %55 = vector.load %arg1[%c0_51, %c1_52, %c1_53, %c0_54] : memref<1x36x9x4xbf16, #tpu.memory_space<vmem>>, vector<1x8x8x4xbf16>
    %56 = vector.shape_cast %55 : vector<1x8x8x4xbf16> to vector<8x8x4xbf16>
    %57 = vector.shape_cast %56 : vector<8x8x4xbf16> to vector<64x4xbf16>
    %c8 = arith.constant 8 : index
    %c0_55 = arith.constant 0 : index
    %c0_56 = arith.constant 0 : index
    %58 = vector.load %arg2[%c8, %c0_55, %c0_56] : memref<9x4x8xbf16, #tpu.memory_space<vmem>>, vector<1x4x8xbf16>
    %59 = vector.shape_cast %58 : vector<1x4x8xbf16> to vector<4x8xbf16>
    %cst_57 = arith.constant dense<0.000000e+00> : vector<64x8xf32>
    %60 = tpu.matmul %57, %59, %cst_57 {dimension_numbers = #tpu.dot_dimension_numbers<[1], [0], [0], [1], [0, 0, 1, 1], [], []>} : vector<64x4xbf16>, vector<4x8xbf16>, vector<64x8xf32> -> vector<64x8xf32>
    %61 = arith.addf %54, %60 : vector<64x8xf32>
    %c0_58 = arith.constant 0 : index
    %c0_59 = arith.constant 0 : index
    %62 = vector.load %arg3[%c0_58, %c0_59] : memref<1x8xf32, #tpu.memory_space<vmem>>, vector<1x8xf32>
    %63 = vector.broadcast %62 : vector<1x8xf32> to vector<64x8xf32>
    %64 = arith.addf %61, %63 : vector<64x8xf32>
    %cst_60 = arith.constant 0.000000e+00 : f32
    %65 = vector.broadcast %cst_60 : f32 to vector<64x8xf32>
    %66 = arith.cmpf ogt, %64, %65 : vector<64x8xf32>
    %c0_61 = arith.constant 0 : index
    %c0_62 = arith.constant 0 : index
    %67 = vector.load %arg4[%c0_61, %c0_62] : memref<1x8xf32, #tpu.memory_space<vmem>>, vector<1x8xf32>
    %68 = vector.broadcast %67 : vector<1x8xf32> to vector<64x8xf32>
    %69 = arith.mulf %68, %64 : vector<64x8xf32>
    %70 = arith.select %66, %64, %69 : vector<64x8xi1>, vector<64x8xf32>
    %c0_63 = arith.constant 0 : index
    %c0_64 = arith.constant 0 : index
    %c0_65 = arith.constant 0 : index
    %71 = vector.load %arg5[%c0_63, %c0_64, %c0_65] : memref<1x64x8xf32, #tpu.memory_space<vmem>>, vector<1x64x8xf32>
    %72 = vector.shape_cast %71 : vector<1x64x8xf32> to vector<64x8xf32>
    %73 = vector.shape_cast %70 : vector<64x8xf32> to vector<1x64x8xf32>
    tpu.vector_store %arg5[%c0_63, %c0_64, %c0_65], %73 {strides = array<i32>} : memref<1x64x8xf32, #tpu.memory_space<vmem>>, vector<1x64x8xf32>,
    return
  }
  func.func @transform_0(%arg0: i32) -> (i32, i32, i32, i32) {
    %c0_i32 = arith.constant 0 : i32
    %c0_i32_0 = arith.constant 0 : i32
    %c0_i32_1 = arith.constant 0 : i32
    %c0_i32_2 = arith.constant 0 : i32
    return %arg0, %c0_i32, %c0_i32_0, %c0_i32_1 : i32, i32, i32, i32
  }
  func.func @transform_1(%arg0: i32) -> (i32, i32, i32) {
    %c0_i32 = arith.constant 0 : i32
    %c0_i32_0 = arith.constant 0 : i32
    %c0_i32_1 = arith.constant 0 : i32
    %c0_i32_2 = arith.constant 0 : i32
    return %c0_i32, %c0_i32_0, %c0_i32_1 : i32, i32, i32
  }
  func.func @transform_2(%arg0: i32) -> (i32, i32) {
    %c0_i32 = arith.constant 0 : i32
    %c0_i32_0 = arith.constant 0 : i32
    %c0_i32_1 = arith.constant 0 : i32
    return %c0_i32, %c0_i32_0 : i32, i32
  }
  func.func @transform_3(%arg0: i32) -> (i32, i32) {
    %c0_i32 = arith.constant 0 : i32
    %c0_i32_0 = arith.constant 0 : i32
    %c0_i32_1 = arith.constant 0 : i32
    return %c0_i32, %c0_i32_0 : i32, i32
  }
  func.func @transform_4(%arg0: i32) -> (i32, i32, i32) {
    %c0_i32 = arith.constant 0 : i32
    %c0_i32_0 = arith.constant 0 : i32
    %c0_i32_1 = arith.constant 0 : i32
    return %arg0, %c0_i32, %c0_i32_0 : i32, i32, i32
  }
}

</mosaic_0001>

<llo_original>
// kernel: tpu_custom_call.1
$region0: #{tpu_custom_call.1}
  #allocation0 [shape = 'u32[]', space=smem, size = 0x4, offset = 0x4, fixed_abs, tag = 'smem constant byte address 0x4 - core index']
  #allocation1 [shape = 'u32[72,128]{1,0:T(1,128)}', space=vmem, size = 0x9000, scoped, tag = 'internal scratch']
  %s0 = inlined_call_operand.vmem [shape: bf16[2,36,9,4], index: 0, kind: input, shape index: {}]
  %s1 = inlined_call_operand.vmem [shape: bf16[9,4,8], index: 1, kind: input, shape index: {}]
  %s2 = inlined_call_operand.vmem [shape: f32[1,8], index: 2, kind: input, shape index: {}]
  %s3 = inlined_call_operand.vmem [shape: f32[1,8], index: 3, kind: input, shape index: {}]
  %s4 = inlined_call_operand.vmem [shape: f32[2,64,8], index: 4, kind: output, shape index: {}]
  %s5 = sld [smem:[#allocation0]]
  $region49: #{tpu_custom_call.1} parent=0
    _
  %s7 = ssub.s32 1, %s5
  %s8 = scalar_select 0, %s7, %s5
  loop: start=0, step=1, limit=4
  $region2: #{tpu_custom_call.1} parent=0 // loop_pre_header
    _
  $region3: #{tpu_custom_call.1} parent=0 // loop_header
    %s10 = sphi 0, %s14
    %p11 = scmp.ge.s32.totalorder %s10, 4
    %s20 = sphi 0, %s22
    %s23 = sphi 0, %s20
    %s24 = sphi 0, %s23
    %s40 = sphi 0, %s24
    %s44 = sphi 0, %s44
    %s46 = sphi 0, %s44
    %s47 = sphi 0, %s46
    %s61 = sphi 0, %s47
    %s65 = sphi 0, %s65
    %s67 = sphi 0, %s65
    %s68 = sphi 0, %s67
    %s82 = sphi 0, %s68
    %s86 = sphi 0, %s86
    %s88 = sphi 0, %s86
    %s89 = sphi 0, %s88
    %s103 = sphi 0, %s89
    %s109 = sphi 0, %s111
    %s112 = sphi 0, %s109
    %s113 = sphi 0, %s112
    %s129 = sphi 0, %s113
  $region4: #{tpu_custom_call.1} parent=0 // loop_header_branch
    %13 = sbr.rel (%p11) target = $region8
  $region5: #{tpu_custom_call.1} parent=0 // loop_body
    %s15 = ssub.s32 %s10, 1
    %s16 = ssub.s32 %s10, 2
    %s17 = sadd.s32 %s10, 1
    %s18 = ssub.s32 %s10, %s17
    %p19 = scmp.eq.s32.totalorder %s18, 0
    %s21 = sadd.s32 %s20, 1
    %s22 = scalar_select %p19, %s20, %s21
    %p25 = pneg %p19
    %p26 = scmp.eq.s32.totalorder %s10, 1
    %p27 = por %p25, %p26
    %p28 = scmp.ne.s32.totalorder %s20, %s23
    %p29 = scmp.eq.s32.totalorder %s10, 0
    %p30 = por %p28, %p29
    %p31 = scmp.ne.s32.totalorder %s20, %s23
    %p32 = scmp.eq.s32.totalorder %s15, 1
    %p33 = por %p31, %p32
    %p34 = scmp.ne.s32.totalorder %s23, %s24
    %p35 = scmp.eq.s32.totalorder %s15, 0
    %p36 = por %p34, %p35
    %p37 = scmp.ne.s32.totalorder %s23, %s24
    %p38 = scmp.eq.s32.totalorder %s16, 1
    %p39 = por %p37, %p38
    %p41 = scmp.ne.s32.totalorder %s24, %s40
    %p42 = scmp.eq.s32.totalorder %s16, 0
    %p43 = por %p41, %p42
    %s45 = sadd.s32 %s44, 1
    %p48 = scmp.eq.s32.totalorder %s10, 1
    %p49 = scmp.ne.s32.totalorder %s44, %s46
    %p50 = scmp.eq.s32.totalorder %s10, 0
    %p51 = por %p49, %p50
    %p52 = scmp.ne.s32.totalorder %s44, %s46
    %p53 = scmp.eq.s32.totalorder %s15, 1
    %p54 = por %p52, %p53
    %p55 = scmp.ne.s32.totalorder %s46, %s47
    %p56 = scmp.eq.s32.totalorder %s15, 0
    %p57 = por %p55, %p56
    %p58 = scmp.ne.s32.totalorder %s46, %s47
    %p59 = scmp.eq.s32.totalorder %s16, 1
    %p60 = por %p58, %p59
    %p62 = scmp.ne.s32.totalorder %s47, %s61
    %p63 = scmp.eq.s32.totalorder %s16, 0
    %p64 = por %p62, %p63
    %s66 = sadd.s32 %s65, 1
    %p69 = scmp.eq.s32.totalorder %s10, 1
    %p70 = scmp.ne.s32.totalorder %s65, %s67
    %p71 = scmp.eq.s32.totalorder %s10, 0
    %p72 = por %p70, %p71
    %p73 = scmp.ne.s32.totalorder %s65, %s67
    %p74 = scmp.eq.s32.totalorder %s15, 1
    %p75 = por %p73, %p74
    %p76 = scmp.ne.s32.totalorder %s67, %s68
    %p77 = scmp.eq.s32.totalorder %s15, 0
    %p78 = por %p76, %p77
    %p79 = scmp.ne.s32.totalorder %s67, %s68
    %p80 = scmp.eq.s32.totalorder %s16, 1
    %p81 = por %p79, %p80
    %p83 = scmp.ne.s32.totalorder %s68, %s82
    %p84 = scmp.eq.s32.totalorder %s16, 0
    %p85 = por %p83, %p84
    %s87 = sadd.s32 %s86, 1
    %p90 = scmp.eq.s32.totalorder %s10, 1
    %p91 = scmp.ne.s32.totalorder %s86, %s88
    %p92 = scmp.eq.s32.totalorder %s10, 0
    %p93 = por %p91, %p92
    %p94 = scmp.ne.s32.totalorder %s86, %s88
    %p95 = scmp.eq.s32.totalorder %s15, 1
    %p96 = por %p94, %p95
    %p97 = scmp.ne.s32.totalorder %s88, %s89
    %p98 = scmp.eq.s32.totalorder %s15, 0
    %p99 = por %p97, %p98
    %p100 = scmp.ne.s32.totalorder %s88, %s89
    %p101 = scmp.eq.s32.totalorder %s16, 1
    %p102 = por %p100, %p101
    %p104 = scmp.ne.s32.totalorder %s89, %s103
    %p105 = scmp.eq.s32.totalorder %s16, 0
    %p106 = por %p104, %p105
    %s107 = ssub.s32 %s10, %s17
    %p108 = scmp.eq.s32.totalorder %s107, 0
    %s110 = sadd.s32 %s109, 1
    %s111 = scalar_select %p108, %s109, %s110
    %p114 = pneg %p108
    %p115 = scmp.eq.s32.totalorder %s10, 1
    %p116 = por %p114, %p115
    %p117 = scmp.ne.s32.totalorder %s109, %s112
    %p118 = scmp.eq.s32.totalorder %s10, 0
    %p119 = por %p117, %p118
    %p120 = scmp.ne.s32.totalorder %s109, %s112
    %p121 = scmp.eq.s32.totalorder %s15, 1
    %p122 = por %p120, %p121
    %p123 = scmp.ne.s32.totalorder %s112, %s113
    %p124 = scmp.eq.s32.totalorder %s15, 0
    %p125 = por %p123, %p124
    %p126 = scmp.ne.s32.totalorder %s112, %s113
    %p127 = scmp.eq.s32.totalorder %s16, 1
    %p128 = por %p126, %p127
    %p130 = scmp.ne.s32.totalorder %s113, %s129
    %p131 = scmp.eq.s32.totalorder %s16, 0
    %p132 = por %p130, %p131
    %p133 = scmp.le.s32.totalorder 1, %s10
    %p134 = scmp.lt.s32.totalorder %s10, 3
    %p135 = pnand %p133, %p134
    %p136 = pneg %p135
    // Predicated region
    $region9: #{tpu_custom_call.1} parent=5 // pred_check
      _
    $region10: #{tpu_custom_call.1} parent=5 // pred_check_branch
      %138 = sbr.rel (%p135) target = $region12
    $region11: #{tpu_custom_call.1} parent=5 // pred_region
      %s139 = ssub.s32 %s10, 1
      // Predicated region
      $region13: #{tpu_custom_call.1} parent=11 // pred_check
        %p140 = pneg %p57
      $region14: #{tpu_custom_call.1} parent=11 // pred_check_branch
        %142 = sbr.rel (%p140) target = $region16
      $region15: #{tpu_custom_call.1} parent=11 // pred_region
        _
      $region16: #{tpu_custom_call.1} parent=11 // pred_fallthru
        _
      // Predicated region
      $region17: #{tpu_custom_call.1} parent=11 // pred_check
        %p143 = pneg %p78
      $region18: #{tpu_custom_call.1} parent=11 // pred_check_branch
        %145 = sbr.rel (%p143) target = $region20
      $region19: #{tpu_custom_call.1} parent=11 // pred_region
        _
      $region20: #{tpu_custom_call.1} parent=11 // pred_fallthru
        _
      // Predicated region
      $region21: #{tpu_custom_call.1} parent=11 // pred_check
        %p146 = pneg %p99
      $region22: #{tpu_custom_call.1} parent=11 // pred_check_branch
        %148 = sbr.rel (%p146) target = $region24
      $region23: #{tpu_custom_call.1} parent=11 // pred_region
        _
      $region24: #{tpu_custom_call.1} parent=11 // pred_fallthru
        _
    $region12: #{tpu_custom_call.1} parent=5 // pred_fallthru
      _
    %p149 = scmp.lt.s32.totalorder %s10, 2
    // Predicated region
    $region25: #{tpu_custom_call.1} parent=5 // pred_check
      %p150 = pneg %p149
    $region26: #{tpu_custom_call.1} parent=5 // pred_check_branch
      %152 = sbr.rel (%p150) target = $region28
    $region27: #{tpu_custom_call.1} parent=5 // pred_region
      // Predicated region
      $region29: #{tpu_custom_call.1} parent=27 // pred_check
        %p153 = pneg %p30
      $region30: #{tpu_custom_call.1} parent=27 // pred_check_branch
        %155 = sbr.rel (%p153) target = $region32
      $region31: #{tpu_custom_call.1} parent=27 // pred_region
        %p156 = scmp.lt.s32.totalorder %s10, 1
        %s157 = scalar_select %p156, %s10, 1
        %s158 = smul.addr %s157, 72
        %s159 = smul.addr %s158, 4
        %s160 = scalar_lea.vmem %s0, %s159
      $region32: #{tpu_custom_call.1} parent=27 // pred_fallthru
        _
    $region28: #{tpu_custom_call.1} parent=5 // pred_fallthru
      _
    %p161 = scmp.le.s32.totalorder 1, %s10
    %p162 = scmp.lt.s32.totalorder %s10, 3
    %p163 = pnand %p161, %p162
    %p164 = pneg %p163
    // Predicated region
    $region33: #{tpu_custom_call.1} parent=5 // pred_check
      _
    $region34: #{tpu_custom_call.1} parent=5 // pred_check_branch
      %166 = sbr.rel (%p163) target = $region36
    $region35: #{tpu_custom_call.1} parent=5 // pred_region
      %s167 = ssub.s32 %s10, 1
      %p168 = scmp.lt.s32.totalorder %s15, 1
      %s169 = scalar_select %p168, %s15, 1
      %s170 = smul.addr %s169, 72
      %s171 = smul.addr %s170, 4
      %s172 = scalar_lea.vmem %s0, %s171
      %p173 = pneg %p36
      %p174 = pneg %p33
      %p175 = pneg %p57
      %p176 = pneg %p54
      %p177 = pneg %p78
      %p178 = pneg %p75
      %p179 = pneg %p99
      %p180 = pneg %p96
      %p181 = pneg %p125
      %p182 = pneg %p122
      %p183 = scmp.lt.s32.totalorder %s15, 1
      %s184 = scalar_select %p183, %s15, 1
      %s185 = smul.addr %s184, 8
      %s186 = smul.addr %s185, 8
      %s187 = scalar_lea.vmem %s4, %s186
      %p188 = scmp.lt.s32.totalorder %s15, 1
      %s189 = scalar_select %p188, %s15, 1
      %s190 = smul.addr %s189, 72
      %s191 = smul.addr %s190, 4
      %s192 = scalar_lea.vmem %s0, %s191
      %p193 = scmp.lt.s32.totalorder %s15, 1
      %s194 = scalar_select %p193, %s15, 1
      %s195 = smul.addr %s194, 8
      %s196 = smul.addr %s195, 8
      %s197 = scalar_lea.vmem %s4, %s196
      %v199 = vld [vmem:[%s192] sm:$0xf]
      %v200 = vld [vmem:[%s192 + $0x8] sm:$0xf]
      %v201 = vld [vmem:[%s192 + $0x10] sm:$0xf]
      %v202 = vld [vmem:[%s192 + $0x18] sm:$0xf]
      %v203 = vld [vmem:[%s192 + $0x20] sm:$0xf]
      %v204 = vld [vmem:[%s192 + $0x28] sm:$0xf]
      %v205 = vld [vmem:[%s192 + $0x30] sm:$0xf]
      %v206 = vld [vmem:[%s192 + $0x38] sm:$0xf]
      %v207 = vld [vmem:[%s1] sm:$0x3]
      %s208 = scalar_lea.vmem %s192, 72
      %v209 = vld [vmem:[%s208] sm:$0xf]
      %v210 = vld [vmem:[%s208 + $0x8] sm:$0xf]
      %v211 = vld [vmem:[%s208 + $0x10] sm:$0xf]
      %v212 = vld [vmem:[%s208 + $0x18] sm:$0xf]
      %v213 = vld [vmem:[%s208 + $0x20] sm:$0xf]
      %v214 = vld [vmem:[%s208 + $0x28] sm:$0xf]
      %v215 = vld [vmem:[%s208 + $0x30] sm:$0xf]
      %v216 = vld [vmem:[%s208 + $0x38] sm:$0xf]
      %s217 = scalar_lea.vmem %s1, 2
      %v218 = vld [vmem:[%s217] sm:$0x3]
      %v227 = vunpack.c.l.b16 %v209
      %v228 = vunpack.c.l.b16 %v210
      %v229 = vunpack.c.l.b16 %v211
      %v230 = vunpack.c.l.b16 %v212
      %v231 = vunpack.c.l.b16 %v213
      %v232 = vunpack.c.l.b16 %v214
      %v233 = vunpack.c.l.b16 %v215
      %v234 = vunpack.c.l.b16 %v216
      %v235 = vpack.c.b16 %v228, %v227
      %v236 = vpack.c.b16 %v230, %v229
      %v237 = vpack.c.b16 %v232, %v231
      %v238 = vpack.c.b16 %v234, %v233
      %vm239 = vcmask 31744
      %v241 = vsel %vm239, %v235, 0
      %v244 = vsel %vm239, %v236, 0
      %v247 = vsel %vm239, %v237, 0
      %v250 = vsel %vm239, %v238, 0
      %vm252 = vcmask 1041408
      %v254 = vsel %vm252, %v218, 0
      %256 = vmatpush.bf16.msra.mxu0 0
      %257 = vmatpush.bf16.msra.mxu0 0
      %258 = vmatpush.bf16.msra.mxu0 0
      %259 = vmatpush.bf16.msra.mxu0 0
      %260 = vmatpush.bf16.msra.mxu0 0
      %261 = vmatpush.bf16.msra.mxu0 0
      %262 = vmatpush.bf16.msra.mxu0 0
      %263 = vmatpush.bf16.msra.mxu0 %v254
      %264 = vmatmul.bf16.gmra.mxu0 %v241
      %v265 = vpop.f32.mrf.mxu0
      %v266 = vadd.f32 0.0, %v265
      %v267 = vpop.f32.mrf.mxu0
      %v268 = vadd.f32 0.0, %v267
      %269 = vmatmul.bf16.gmra.mxu0 %v244
      %v270 = vpop.f32.mrf.mxu0
      %v271 = vadd.f32 0.0, %v270
      %v272 = vpop.f32.mrf.mxu0
      %v273 = vadd.f32 0.0, %v272
      %274 = vmatmul.bf16.gmra.mxu0 %v247
      %v275 = vpop.f32.mrf.mxu0
      %v276 = vadd.f32 0.0, %v275
      %v277 = vpop.f32.mrf.mxu0
      %v278 = vadd.f32 0.0, %v277
      %279 = vmatmul.bf16.gmra.mxu0 %v250
      %v280 = vpop.f32.mrf.mxu0
      %v281 = vadd.f32 0.0, %v280
      %v282 = vpop.f32.mrf.mxu0
      %v283 = vadd.f32 0.0, %v282
      %284 = vdwg.mxu0
      %v293 = vunpack.c.l.b16 %v199
      %v294 = vunpack.c.l.b16 %v200
      %v295 = vunpack.c.l.b16 %v201
      %v296 = vunpack.c.l.b16 %v202
      %v297 = vunpack.c.l.b16 %v203
      %v298 = vunpack.c.l.b16 %v204
      %v299 = vunpack.c.l.b16 %v205
      %v300 = vunpack.c.l.b16 %v206
      %v301 = vpack.c.b16 %v294, %v293
      %v302 = vpack.c.b16 %v296, %v295
      %v303 = vpack.c.b16 %v298, %v297
      %v304 = vpack.c.b16 %v300, %v299
      %v306 = vsel %vm239, %v301, 0
      %v309 = vsel %vm239, %v302, 0
      %v312 = vsel %vm239, %v303, 0
      %v315 = vsel %vm239, %v304, 0
      %v318 = vsel %vm252, %v207, 0
      %320 = vmatpush.bf16.msra.mxu0 0
      %321 = vmatpush.bf16.msra.mxu0 0
      %322 = vmatpush.bf16.msra.mxu0 0
      %323 = vmatpush.bf16.msra.mxu0 0
      %324 = vmatpush.bf16.msra.mxu0 0
      %325 = vmatpush.bf16.msra.mxu0 0
      %326 = vmatpush.bf16.msra.mxu0 0
      %327 = vmatpush.bf16.msra.mxu0 %v318
      %328 = vmatmul.bf16.gmra.mxu0 %v306
      %v329 = vpop.f32.mrf.mxu0
      %v330 = vadd.f32 %v266, %v329
      %v331 = vpop.f32.mrf.mxu0
      %v332 = vadd.f32 %v268, %v331
      %333 = vmatmul.bf16.gmra.mxu0 %v309
      %v334 = vpop.f32.mrf.mxu0
      %v335 = vadd.f32 %v271, %v334
      %v336 = vpop.f32.mrf.mxu0
      %v337 = vadd.f32 %v273, %v336
      %338 = vmatmul.bf16.gmra.mxu0 %v312
      %v339 = vpop.f32.mrf.mxu0
      %v340 = vadd.f32 %v276, %v339
      %v341 = vpop.f32.mrf.mxu0
      %v342 = vadd.f32 %v278, %v341
      %343 = vmatmul.bf16.gmra.mxu0 %v315
      %v344 = vpop.f32.mrf.mxu0
      %v345 = vadd.f32 %v281, %v344
      %v346 = vpop.f32.mrf.mxu0
      %v347 = vadd.f32 %v283, %v346
      %348 = vdwg.mxu0
      %v349 = vld [vmem:[%s192] sm:$0xf]
      %v350 = vld [vmem:[%s192 + $0x4] sm:$0x1]
      %v351 = vld [vmem:[%s192 + $0x8] sm:$0xf]
      %v352 = vld [vmem:[%s192 + $0xc] sm:$0x1]
      %v353 = vld [vmem:[%s192 + $0x10] sm:$0xf]
      %v354 = vld [vmem:[%s192 + $0x14] sm:$0x1]
      %v355 = vld [vmem:[%s192 + $0x18] sm:$0xf]
      %v356 = vld [vmem:[%s192 + $0x1c] sm:$0x1]
      %v357 = vld [vmem:[%s192 + $0x20] sm:$0xf]
      %v358 = vld [vmem:[%s192 + $0x24] sm:$0x1]
      %v359 = vld [vmem:[%s192 + $0x28] sm:$0xf]
      %v360 = vld [vmem:[%s192 + $0x2c] sm:$0x1]
      %v361 = vld [vmem:[%s192 + $0x30] sm:$0xf]
      %v362 = vld [vmem:[%s192 + $0x34] sm:$0x1]
      %v363 = vld [vmem:[%s192 + $0x38] sm:$0xf]
      %v364 = vld [vmem:[%s192 + $0x3c] sm:$0x1]
      %vm365 = vsmask.f32 3328
      %vm366 = vsmask.f32 7440
      %vm367 = vmor %vm365, %vm366
      %v369 = vshrl.u32 %v349, 16
      %v371 = vrot.slane %v369, 4
      %v372 = vshll.u32 %v349, 16
      %v374 = vrot.slane %v372, 5
      %v375 = vor.u32 %v371, %v374
      %v376 = vrot.slane %v375, 4
      %v378 = vshll.u32 %v350, 16
      %v380 = vrot.slane %v378, 5
      %v381 = vsel %vm367, %v376, %v380
      %v383 = vshrl.u32 %v351, 16
      %v385 = vrot.slane %v383, 4
      %v386 = vshll.u32 %v351, 16
      %v388 = vrot.slane %v386, 5
      %v389 = vor.u32 %v385, %v388
      %v390 = vrot.slane %v389, 4
      %v392 = vshll.u32 %v352, 16
      %v394 = vrot.slane %v392, 5
      %v395 = vsel %vm367, %v390, %v394
      %v397 = vshrl.u32 %v353, 16
      %v399 = vrot.slane %v397, 4
      %v400 = vshll.u32 %v353, 16
      %v402 = vrot.slane %v400, 5
      %v403 = vor.u32 %v399, %v402
      %v404 = vrot.slane %v403, 4
      %v406 = vshll.u32 %v354, 16
      %v408 = vrot.slane %v406, 5
      %v409 = vsel %vm367, %v404, %v408
      %v411 = vshrl.u32 %v355, 16
      %v413 = vrot.slane %v411, 4
      %v414 = vshll.u32 %v355, 16
      %v416 = vrot.slane %v414, 5
      %v417 = vor.u32 %v413, %v416
      %v418 = vrot.slane %v417, 4
      %v420 = vshll.u32 %v356, 16
      %v422 = vrot.slane %v420, 5
      %v423 = vsel %vm367, %v418, %v422
      %v425 = vshrl.u32 %v357, 16
      %v427 = vrot.slane %v425, 4
      %v428 = vshll.u32 %v357, 16
      %v430 = vrot.slane %v428, 5
      %v431 = vor.u32 %v427, %v430
      %v432 = vrot.slane %v431, 4
      %v434 = vshll.u32 %v358, 16
      %v436 = vrot.slane %v434, 5
      %v437 = vsel %vm367, %v432, %v436
      %v439 = vshrl.u32 %v359, 16
      %v441 = vrot.slane %v439, 4
      %v442 = vshll.u32 %v359, 16
      %v444 = vrot.slane %v442, 5
      %v445 = vor.u32 %v441, %v444
      %v446 = vrot.slane %v445, 4
      %v448 = vshll.u32 %v360, 16
      %v450 = vrot.slane %v448, 5
      %v451 = vsel %vm367, %v446, %v450
      %v453 = vshrl.u32 %v361, 16
      %v455 = vrot.slane %v453, 4
      %v456 = vshll.u32 %v361, 16
      %v458 = vrot.slane %v456, 5
      %v459 = vor.u32 %v455, %v458
      %v460 = vrot.slane %v459, 4
      %v462 = vshll.u32 %v362, 16
      %v464 = vrot.slane %v462, 5
      %v465 = vsel %vm367, %v460, %v464
      %v467 = vshrl.u32 %v363, 16
      %v469 = vrot.slane %v467, 4
      %v470 = vshll.u32 %v363, 16
      %v472 = vrot.slane %v470, 5
      %v473 = vor.u32 %v469, %v472
      %v474 = vrot.slane %v473, 4
      %v476 = vshll.u32 %v364, 16
      %v478 = vrot.slane %v476, 5
      %v479 = vsel %vm367, %v474, %v478
      %s480 = scalar_lea.vmem %s1, 4
      %v481 = vld [vmem:[%s480] sm:$0x3]
      %v482 = vunpack.c.l.b16 %v381
      %v483 = vunpack.c.l.b16 %v395
      %v484 = vunpack.c.l.b16 %v409
      %v485 = vunpack.c.l.b16 %v423
      %v486 = vunpack.c.l.b16 %v437
      %v487 = vunpack.c.l.b16 %v451
      %v488 = vunpack.c.l.b16 %v465
      %v489 = vunpack.c.l.b16 %v479
      %v490 = vpack.c.b16 %v483, %v482
      %v491 = vpack.c.b16 %v485, %v484
      %v492 = vpack.c.b16 %v487, %v486
      %v493 = vpack.c.b16 %v489, %v488
      %v495 = vsel %vm239, %v490, 0
      %v498 = vsel %vm239, %v491, 0
      %v501 = vsel %vm239, %v492, 0
      %v504 = vsel %vm239, %v493, 0
      %v507 = vsel %vm252, %v481, 0
      %509 = vmatpush.bf16.msra.mxu0 0
      %510 = vmatpush.bf16.msra.mxu0 0
      %511 = vmatpush.bf16.msra.mxu0 0
      %512 = vmatpush.bf16.msra.mxu0 0
      %513 = vmatpush.bf16.msra.mxu0 0
      %514 = vmatpush.bf16.msra.mxu0 0
      %515 = vmatpush.bf16.msra.mxu0 0
      %516 = vmatpush.bf16.msra.mxu0 %v507
      %517 = vmatmul.bf16.gmra.mxu0 %v495
      %v518 = vpop.f32.mrf.mxu0
      %v519 = vadd.f32 0.0, %v518
      %v520 = vpop.f32.mrf.mxu0
      %v521 = vadd.f32 0.0, %v520
      %522 = vmatmul.bf16.gmra.mxu0 %v498
      %v523 = vpop.f32.mrf.mxu0
      %v524 = vadd.f32 0.0, %v523
      %v525 = vpop.f32.mrf.mxu0
      %v526 = vadd.f32 0.0, %v525
      %527 = vmatmul.bf16.gmra.mxu0 %v501
      %v528 = vpop.f32.mrf.mxu0
      %v529 = vadd.f32 0.0, %v528
      %v530 = vpop.f32.mrf.mxu0
      %v531 = vadd.f32 0.0, %v530
      %532 = vmatmul.bf16.gmra.mxu0 %v504
      %v533 = vpop.f32.mrf.mxu0
      %v534 = vadd.f32 0.0, %v533
      %v535 = vpop.f32.mrf.mxu0
      %v536 = vadd.f32 0.0, %v535
      %537 = vdwg.mxu0
      %v538 = vadd.f32 %v330, %v519
      %v539 = vadd.f32 %v332, %v521
      %v540 = vadd.f32 %v335, %v524
      %v541 = vadd.f32 %v337, %v526
      %v542 = vadd.f32 %v340, %v529
      %v543 = vadd.f32 %v342, %v531
      %v544 = vadd.f32 %v345, %v534
      %v545 = vadd.f32 %v347, %v536
      %s546 = scalar_lea.vmem %s192, 144
      %v547 = vld [vmem:[%s546] sm:$0xf]
      %v548 = vld [vmem:[%s546 + $0x8] sm:$0xf]
      %v549 = vld [vmem:[%s546 + $0x10] sm:$0xf]
      %v550 = vld [vmem:[%s546 + $0x18] sm:$0xf]
      %v551 = vld [vmem:[%s546 + $0x20] sm:$0xf]
      %v552 = vld [vmem:[%s546 + $0x28] sm:$0xf]
      %v553 = vld [vmem:[%s546 + $0x30] sm:$0xf]
      %v554 = vld [vmem:[%s546 + $0x38] sm:$0xf]
      %s555 = scalar_lea.vmem %s1, 6
      %v556 = vld [vmem:[%s555] sm:$0x3]
      %v565 = vunpack.c.l.b16 %v547
      %v566 = vunpack.c.l.b16 %v548
      %v567 = vunpack.c.l.b16 %v549
      %v568 = vunpack.c.l.b16 %v550
      %v569 = vunpack.c.l.b16 %v551
      %v570 = vunpack.c.l.b16 %v552
      %v571 = vunpack.c.l.b16 %v553
      %v572 = vunpack.c.l.b16 %v554
      %v573 = vpack.c.b16 %v566, %v565
      %v574 = vpack.c.b16 %v568, %v567
      %v575 = vpack.c.b16 %v570, %v569
      %v576 = vpack.c.b16 %v572, %v571
      %v578 = vsel %vm239, %v573, 0
      %v581 = vsel %vm239, %v574, 0
      %v584 = vsel %vm239, %v575, 0
      %v587 = vsel %vm239, %v576, 0
      %v590 = vsel %vm252, %v556, 0
      %592 = vmatpush.bf16.msra.mxu0 0
      %593 = vmatpush.bf16.msra.mxu0 0
      %594 = vmatpush.bf16.msra.mxu0 0
      %595 = vmatpush.bf16.msra.mxu0 0
      %596 = vmatpush.bf16.msra.mxu0 0
      %597 = vmatpush.bf16.msra.mxu0 0
      %598 = vmatpush.bf16.msra.mxu0 0
      %599 = vmatpush.bf16.msra.mxu0 %v590
      %600 = vmatmul.bf16.gmra.mxu0 %v578
      %v601 = vpop.f32.mrf.mxu0
      %v602 = vadd.f32 0.0, %v601
      %v603 = vpop.f32.mrf.mxu0
      %v604 = vadd.f32 0.0, %v603
      %605 = vmatmul.bf16.gmra.mxu0 %v581
      %v606 = vpop.f32.mrf.mxu0
      %v607 = vadd.f32 0.0, %v606
      %v608 = vpop.f32.mrf.mxu0
      %v609 = vadd.f32 0.0, %v608
      %610 = vmatmul.bf16.gmra.mxu0 %v584
      %v611 = vpop.f32.mrf.mxu0
      %v612 = vadd.f32 0.0, %v611
      %v613 = vpop.f32.mrf.mxu0
      %v614 = vadd.f32 0.0, %v613
      %615 = vmatmul.bf16.gmra.mxu0 %v587
      %v616 = vpop.f32.mrf.mxu0
      %v617 = vadd.f32 0.0, %v616
      %v618 = vpop.f32.mrf.mxu0
      %v619 = vadd.f32 0.0, %v618
      %620 = vdwg.mxu0
      %v621 = vadd.f32 %v538, %v602
      %v622 = vadd.f32 %v539, %v604
      %v623 = vadd.f32 %v540, %v607
      %v624 = vadd.f32 %v541, %v609
      %v625 = vadd.f32 %v542, %v612
      %v626 = vadd.f32 %v543, %v614
      %v627 = vadd.f32 %v544, %v617
      %v628 = vadd.f32 %v545, %v619
      %s629 = scalar_lea.vmem %s192, 216
      %v630 = vld [vmem:[%s629] sm:$0xf]
      %v631 = vld [vmem:[%s629 + $0x8] sm:$0xf]
      %v632 = vld [vmem:[%s629 + $0x10] sm:$0xf]
      %v633 = vld [vmem:[%s629 + $0x18] sm:$0xf]
      %v634 = vld [vmem:[%s629 + $0x20] sm:$0xf]
      %v635 = vld [vmem:[%s629 + $0x28] sm:$0xf]
      %v636 = vld [vmem:[%s629 + $0x30] sm:$0xf]
      %v637 = vld [vmem:[%s629 + $0x38] sm:$0xf]
      %s638 = scalar_lea.vmem %s1, 8
      %v639 = vld [vmem:[%s638] sm:$0x3]
      %v648 = vunpack.c.l.b16 %v630
      %v649 = vunpack.c.l.b16 %v631
      %v650 = vunpack.c.l.b16 %v632
      %v651 = vunpack.c.l.b16 %v633
      %v652 = vunpack.c.l.b16 %v634
      %v653 = vunpack.c.l.b16 %v635
      %v654 = vunpack.c.l.b16 %v636
      %v655 = vunpack.c.l.b16 %v637
      %v656 = vpack.c.b16 %v649, %v648
      %v657 = vpack.c.b16 %v651, %v650
      %v658 = vpack.c.b16 %v653, %v652
      %v659 = vpack.c.b16 %v655, %v654
      %v661 = vsel %vm239, %v656, 0
      %v664 = vsel %vm239, %v657, 0
      %v667 = vsel %vm239, %v658, 0
      %v670 = vsel %vm239, %v659, 0
      %v673 = vsel %vm252, %v639, 0
      %675 = vmatpush.bf16.msra.mxu0 0
      %676 = vmatpush.bf16.msra.mxu0 0
      %677 = vmatpush.bf16.msra.mxu0 0
      %678 = vmatpush.bf16.msra.mxu0 0
      %679 = vmatpush.bf16.msra.mxu0 0
      %680 = vmatpush.bf16.msra.mxu0 0
      %681 = vmatpush.bf16.msra.mxu0 0
      %682 = vmatpush.bf16.msra.mxu0 %v673
      %683 = vmatmul.bf16.gmra.mxu0 %v661
      %v684 = vpop.f32.mrf.mxu0
      %v685 = vadd.f32 0.0, %v684
      %v686 = vpop.f32.mrf.mxu0
      %v687 = vadd.f32 0.0, %v686
      %688 = vmatmul.bf16.gmra.mxu0 %v664
      %v689 = vpop.f32.mrf.mxu0
      %v690 = vadd.f32 0.0, %v689
      %v691 = vpop.f32.mrf.mxu0
      %v692 = vadd.f32 0.0, %v691
      %693 = vmatmul.bf16.gmra.mxu0 %v667
      %v694 = vpop.f32.mrf.mxu0
      %v695 = vadd.f32 0.0, %v694
      %v696 = vpop.f32.mrf.mxu0
      %v697 = vadd.f32 0.0, %v696
      %698 = vmatmul.bf16.gmra.mxu0 %v670
      %v699 = vpop.f32.mrf.mxu0
      %v700 = vadd.f32 0.0, %v699
      %v701 = vpop.f32.mrf.mxu0
      %v702 = vadd.f32 0.0, %v701
      %703 = vdwg.mxu0
      %v704 = vadd.f32 %v621, %v685
      %v705 = vadd.f32 %v622, %v687
      %v706 = vadd.f32 %v623, %v690
      %v707 = vadd.f32 %v624, %v692
      %v708 = vadd.f32 %v625, %v695
      %v709 = vadd.f32 %v626, %v697
      %v710 = vadd.f32 %v627, %v700
      %v711 = vadd.f32 %v628, %v702
      %v712 = vld [vmem:[%s546] sm:$0xf]
      %v713 = vld [vmem:[%s546 + $0x4] sm:$0x1]
      %v714 = vld [vmem:[%s546 + $0x8] sm:$0xf]
      %v715 = vld [vmem:[%s546 + $0xc] sm:$0x1]
      %v716 = vld [vmem:[%s546 + $0x10] sm:$0xf]
      %v717 = vld [vmem:[%s546 + $0x14] sm:$0x1]
      %v718 = vld [vmem:[%s546 + $0x18] sm:$0xf]
      %v719 = vld [vmem:[%s546 + $0x1c] sm:$0x1]
      %v720 = vld [vmem:[%s546 + $0x20] sm:$0xf]
      %v721 = vld [vmem:[%s546 + $0x24] sm:$0x1]
      %v722 = vld [vmem:[%s546 + $0x28] sm:$0xf]
      %v723 = vld [vmem:[%s546 + $0x2c] sm:$0x1]
      %v724 = vld [vmem:[%s546 + $0x30] sm:$0xf]
      %v725 = vld [vmem:[%s546 + $0x34] sm:$0x1]
      %v726 = vld [vmem:[%s546 + $0x38] sm:$0xf]
      %v727 = vld [vmem:[%s546 + $0x3c] sm:$0x1]
      %v729 = vshrl.u32 %v712, 16
      %v731 = vrot.slane %v729, 4
      %v732 = vshll.u32 %v712, 16
      %v734 = vrot.slane %v732, 5
      %v735 = vor.u32 %v731, %v734
      %v736 = vrot.slane %v735, 4
      %v738 = vshll.u32 %v713, 16
      %v740 = vrot.slane %v738, 5
      %v741 = vsel %vm367, %v736, %v740
      %v743 = vshrl.u32 %v714, 16
      %v745 = vrot.slane %v743, 4
      %v746 = vshll.u32 %v714, 16
      %v748 = vrot.slane %v746, 5
      %v749 = vor.u32 %v745, %v748
      %v750 = vrot.slane %v749, 4
      %v752 = vshll.u32 %v715, 16
      %v754 = vrot.slane %v752, 5
      %v755 = vsel %vm367, %v750, %v754
      %v757 = vshrl.u32 %v716, 16
      %v759 = vrot.slane %v757, 4
      %v760 = vshll.u32 %v716, 16
      %v762 = vrot.slane %v760, 5
      %v763 = vor.u32 %v759, %v762
      %v764 = vrot.slane %v763, 4
      %v766 = vshll.u32 %v717, 16
      %v768 = vrot.slane %v766, 5
      %v769 = vsel %vm367, %v764, %v768
      %v771 = vshrl.u32 %v718, 16
      %v773 = vrot.slane %v771, 4
      %v774 = vshll.u32 %v718, 16
      %v776 = vrot.slane %v774, 5
      %v777 = vor.u32 %v773, %v776
      %v778 = vrot.slane %v777, 4
      %v780 = vshll.u32 %v719, 16
      %v782 = vrot.slane %v780, 5
      %v783 = vsel %vm367, %v778, %v782
      %v785 = vshrl.u32 %v720, 16
      %v787 = vrot.slane %v785, 4
      %v788 = vshll.u32 %v720, 16
      %v790 = vrot.slane %v788, 5
      %v791 = vor.u32 %v787, %v790
      %v792 = vrot.slane %v791, 4
      %v794 = vshll.u32 %v721, 16
      %v796 = vrot.slane %v794, 5
      %v797 = vsel %vm367, %v792, %v796
      %v799 = vshrl.u32 %v722, 16
      %v801 = vrot.slane %v799, 4
      %v802 = vshll.u32 %v722, 16
      %v804 = vrot.slane %v802, 5
      %v805 = vor.u32 %v801, %v804
      %v806 = vrot.slane %v805, 4
      %v808 = vshll.u32 %v723, 16
      %v810 = vrot.slane %v808, 5
      %v811 = vsel %vm367, %v806, %v810
      %v813 = vshrl.u32 %v724, 16
      %v815 = vrot.slane %v813, 4
      %v816 = vshll.u32 %v724, 16
      %v818 = vrot.slane %v816, 5
      %v819 = vor.u32 %v815, %v818
      %v820 = vrot.slane %v819, 4
      %v822 = vshll.u32 %v725, 16
      %v824 = vrot.slane %v822, 5
      %v825 = vsel %vm367, %v820, %v824
      %v827 = vshrl.u32 %v726, 16
      %v829 = vrot.slane %v827, 4
      %v830 = vshll.u32 %v726, 16
      %v832 = vrot.slane %v830, 5
      %v833 = vor.u32 %v829, %v832
      %v834 = vrot.slane %v833, 4
      %v836 = vshll.u32 %v727, 16
      %v838 = vrot.slane %v836, 5
      %v839 = vsel %vm367, %v834, %v838
      %s840 = scalar_lea.vmem %s1, 10
      %v841 = vld [vmem:[%s840] sm:$0x3]
      %v842 = vunpack.c.l.b16 %v741
      %v843 = vunpack.c.l.b16 %v755
      %v844 = vunpack.c.l.b16 %v769
      %v845 = vunpack.c.l.b16 %v783
      %v846 = vunpack.c.l.b16 %v797
      %v847 = vunpack.c.l.b16 %v811
      %v848 = vunpack.c.l.b16 %v825
      %v849 = vunpack.c.l.b16 %v839
      %v850 = vpack.c.b16 %v843, %v842
      %v851 = vpack.c.b16 %v845, %v844
      %v852 = vpack.c.b16 %v847, %v846
      %v853 = vpack.c.b16 %v849, %v848
      %v855 = vsel %vm239, %v850, 0
      %v858 = vsel %vm239, %v851, 0
      %v861 = vsel %vm239, %v852, 0
      %v864 = vsel %vm239, %v853, 0
      %v867 = vsel %vm252, %v841, 0
      %869 = vmatpush.bf16.msra.mxu0 0
      %870 = vmatpush.bf16.msra.mxu0 0
      %871 = vmatpush.bf16.msra.mxu0 0
      %872 = vmatpush.bf16.msra.mxu0 0
      %873 = vmatpush.bf16.msra.mxu0 0
      %874 = vmatpush.bf16.msra.mxu0 0
      %875 = vmatpush.bf16.msra.mxu0 0
      %876 = vmatpush.bf16.msra.mxu0 %v867
      %877 = vmatmul.bf16.gmra.mxu0 %v855
      %v878 = vpop.f32.mrf.mxu0
      %v879 = vadd.f32 0.0, %v878
      %v880 = vpop.f32.mrf.mxu0
      %v881 = vadd.f32 0.0, %v880
      %882 = vmatmul.bf16.gmra.mxu0 %v858
      %v883 = vpop.f32.mrf.mxu0
      %v884 = vadd.f32 0.0, %v883
      %v885 = vpop.f32.mrf.mxu0
      %v886 = vadd.f32 0.0, %v885
      %887 = vmatmul.bf16.gmra.mxu0 %v861
      %v888 = vpop.f32.mrf.mxu0
      %v889 = vadd.f32 0.0, %v888
      %v890 = vpop.f32.mrf.mxu0
      %v891 = vadd.f32 0.0, %v890
      %892 = vmatmul.bf16.gmra.mxu0 %v864
      %v893 = vpop.f32.mrf.mxu0
      %v894 = vadd.f32 0.0, %v893
      %v895 = vpop.f32.mrf.mxu0
      %v896 = vadd.f32 0.0, %v895
      %897 = vdwg.mxu0
      %v898 = vadd.f32 %v704, %v879
      %v899 = vadd.f32 %v705, %v881
      %v900 = vadd.f32 %v706, %v884
      %v901 = vadd.f32 %v707, %v886
      %v902 = vadd.f32 %v708, %v889
      %v903 = vadd.f32 %v709, %v891
      %v904 = vadd.f32 %v710, %v894
      %v905 = vadd.f32 %v711, %v896
      %s906 = scalar_lea.vmem %s192, 8
      %v907 = vld [vmem:[%s906] sm:$0xf]
      %v908 = vld [vmem:[%s906 + $0x8] sm:$0xf]
      %v909 = vld [vmem:[%s906 + $0x10] sm:$0xf]
      %v910 = vld [vmem:[%s906 + $0x18] sm:$0xf]
      %v911 = vld [vmem:[%s906 + $0x20] sm:$0xf]
      %v912 = vld [vmem:[%s906 + $0x28] sm:$0xf]
      %v913 = vld [vmem:[%s906 + $0x30] sm:$0xf]
      %v914 = vld [vmem:[%s906 + $0x38] sm:$0xf]
      %s915 = scalar_lea.vmem %s1, 12
      %v916 = vld [vmem:[%s915] sm:$0x3]
      %v925 = vunpack.c.l.b16 %v907
      %v926 = vunpack.c.l.b16 %v908
      %v927 = vunpack.c.l.b16 %v909
      %v928 = vunpack.c.l.b16 %v910
      %v929 = vunpack.c.l.b16 %v911
      %v930 = vunpack.c.l.b16 %v912
      %v931 = vunpack.c.l.b16 %v913
      %v932 = vunpack.c.l.b16 %v914
      %v933 = vpack.c.b16 %v926, %v925
      %v934 = vpack.c.b16 %v928, %v927
      %v935 = vpack.c.b16 %v930, %v929
      %v936 = vpack.c.b16 %v932, %v931
      %v938 = vsel %vm239, %v933, 0
      %v941 = vsel %vm239, %v934, 0
      %v944 = vsel %vm239, %v935, 0
      %v947 = vsel %vm239, %v936, 0
      %v950 = vsel %vm252, %v916, 0
      %952 = vmatpush.bf16.msra.mxu0 0
      %953 = vmatpush.bf16.msra.mxu0 0
      %954 = vmatpush.bf16.msra.mxu0 0
      %955 = vmatpush.bf16.msra.mxu0 0
      %956 = vmatpush.bf16.msra.mxu0 0
      %957 = vmatpush.bf16.msra.mxu0 0
      %958 = vmatpush.bf16.msra.mxu0 0
      %959 = vmatpush.bf16.msra.mxu0 %v950
      %960 = vmatmul.bf16.gmra.mxu0 %v938
      %v961 = vpop.f32.mrf.mxu0
      %v962 = vadd.f32 0.0, %v961
      %v963 = vpop.f32.mrf.mxu0
      %v964 = vadd.f32 0.0, %v963
      %965 = vmatmul.bf16.gmra.mxu0 %v941
      %v966 = vpop.f32.mrf.mxu0
      %v967 = vadd.f32 0.0, %v966
      %v968 = vpop.f32.mrf.mxu0
      %v969 = vadd.f32 0.0, %v968
      %970 = vmatmul.bf16.gmra.mxu0 %v944
      %v971 = vpop.f32.mrf.mxu0
      %v972 = vadd.f32 0.0, %v971
      %v973 = vpop.f32.mrf.mxu0
      %v974 = vadd.f32 0.0, %v973
      %975 = vmatmul.bf16.gmra.mxu0 %v947
      %v976 = vpop.f32.mrf.mxu0
      %v977 = vadd.f32 0.0, %v976
      %v978 = vpop.f32.mrf.mxu0
      %v979 = vadd.f32 0.0, %v978
      %980 = vdwg.mxu0
      %v981 = vadd.f32 %v898, %v962
      %v982 = vadd.f32 %v899, %v964
      %v983 = vadd.f32 %v900, %v967
      %v984 = vadd.f32 %v901, %v969
      %v985 = vadd.f32 %v902, %v972
      %v986 = vadd.f32 %v903, %v974
      %v987 = vadd.f32 %v904, %v977
      %v988 = vadd.f32 %v905, %v979
      %s989 = scalar_lea.vmem %s192, 80
      %v990 = vld [vmem:[%s989] sm:$0xf]
      %v991 = vld [vmem:[%s989 + $0x8] sm:$0xf]
      %v992 = vld [vmem:[%s989 + $0x10] sm:$0xf]
      %v993 = vld [vmem:[%s989 + $0x18] sm:$0xf]
      %v994 = vld [vmem:[%s989 + $0x20] sm:$0xf]
      %v995 = vld [vmem:[%s989 + $0x28] sm:$0xf]
      %v996 = vld [vmem:[%s989 + $0x30] sm:$0xf]
      %v997 = vld [vmem:[%s989 + $0x38] sm:$0xf]
      %s998 = scalar_lea.vmem %s1, 14
      %v999 = vld [vmem:[%s998] sm:$0x3]
      %v1008 = vunpack.c.l.b16 %v990
      %v1009 = vunpack.c.l.b16 %v991
      %v1010 = vunpack.c.l.b16 %v992
      %v1011 = vunpack.c.l.b16 %v993
      %v1012 = vunpack.c.l.b16 %v994
      %v1013 = vunpack.c.l.b16 %v995
      %v1014 = vunpack.c.l.b16 %v996
      %v1015 = vunpack.c.l.b16 %v997
      %v1016 = vpack.c.b16 %v1009, %v1008
      %v1017 = vpack.c.b16 %v1011, %v1010
      %v1018 = vpack.c.b16 %v1013, %v1012
      %v1019 = vpack.c.b16 %v1015, %v1014
      %v1021 = vsel %vm239, %v1016, 0
      %v1024 = vsel %vm239, %v1017, 0
      %v1027 = vsel %vm239, %v1018, 0
      %v1030 = vsel %vm239, %v1019, 0
      %v1033 = vsel %vm252, %v999, 0
      %1035 = vmatpush.bf16.msra.mxu0 0
      %1036 = vmatpush.bf16.msra.mxu0 0
      %1037 = vmatpush.bf16.msra.mxu0 0
      %1038 = vmatpush.bf16.msra.mxu0 0
      %1039 = vmatpush.bf16.msra.mxu0 0
      %1040 = vmatpush.bf16.msra.mxu0 0
      %1041 = vmatpush.bf16.msra.mxu0 0
      %1042 = vmatpush.bf16.msra.mxu0 %v1033
      %1043 = vmatmul.bf16.gmra.mxu0 %v1021
      %v1044 = vpop.f32.mrf.mxu0
      %v1045 = vadd.f32 0.0, %v1044
      %v1046 = vpop.f32.mrf.mxu0
      %v1047 = vadd.f32 0.0, %v1046
      %1048 = vmatmul.bf16.gmra.mxu0 %v1024
      %v1049 = vpop.f32.mrf.mxu0
      %v1050 = vadd.f32 0.0, %v1049
      %v1051 = vpop.f32.mrf.mxu0
      %v1052 = vadd.f32 0.0, %v1051
      %1053 = vmatmul.bf16.gmra.mxu0 %v1027
      %v1054 = vpop.f32.mrf.mxu0
      %v1055 = vadd.f32 0.0, %v1054
      %v1056 = vpop.f32.mrf.mxu0
      %v1057 = vadd.f32 0.0, %v1056
      %1058 = vmatmul.bf16.gmra.mxu0 %v1030
      %v1059 = vpop.f32.mrf.mxu0
      %v1060 = vadd.f32 0.0, %v1059
      %v1061 = vpop.f32.mrf.mxu0
      %v1062 = vadd.f32 0.0, %v1061
      %1063 = vdwg.mxu0
      %v1064 = vadd.f32 %v981, %v1045
      %v1065 = vadd.f32 %v982, %v1047
      %v1066 = vadd.f32 %v983, %v1050
      %v1067 = vadd.f32 %v984, %v1052
      %v1068 = vadd.f32 %v985, %v1055
      %v1069 = vadd.f32 %v986, %v1057
      %v1070 = vadd.f32 %v987, %v1060
      %v1071 = vadd.f32 %v988, %v1062
      %v1072 = vld [vmem:[%s906] sm:$0xf]
      %v1073 = vld [vmem:[%s906 + $0x4] sm:$0x1]
      %v1074 = vld [vmem:[%s906 + $0x8] sm:$0xf]
      %v1075 = vld [vmem:[%s906 + $0xc] sm:$0x1]
      %v1076 = vld [vmem:[%s906 + $0x10] sm:$0xf]
      %v1077 = vld [vmem:[%s906 + $0x14] sm:$0x1]
      %v1078 = vld [vmem:[%s906 + $0x18] sm:$0xf]
      %v1079 = vld [vmem:[%s906 + $0x1c] sm:$0x1]
      %v1080 = vld [vmem:[%s906 + $0x20] sm:$0xf]
      %v1081 = vld [vmem:[%s906 + $0x24] sm:$0x1]
      %v1082 = vld [vmem:[%s906 + $0x28] sm:$0xf]
      %v1083 = vld [vmem:[%s906 + $0x2c] sm:$0x1]
      %v1084 = vld [vmem:[%s906 + $0x30] sm:$0xf]
      %v1085 = vld [vmem:[%s906 + $0x34] sm:$0x1]
      %v1086 = vld [vmem:[%s906 + $0x38] sm:$0xf]
      %v1087 = vld [vmem:[%s906 + $0x3c] sm:$0x1]
      %v1089 = vshrl.u32 %v1072, 16
      %v1091 = vrot.slane %v1089, 4
      %v1092 = vshll.u32 %v1072, 16
      %v1094 = vrot.slane %v1092, 5
      %v1095 = vor.u32 %v1091, %v1094
      %v1096 = vrot.slane %v1095, 4
      %v1098 = vshll.u32 %v1073, 16
      %v1100 = vrot.slane %v1098, 5
      %v1101 = vsel %vm367, %v1096, %v1100
      %v1103 = vshrl.u32 %v1074, 16
      %v1105 = vrot.slane %v1103, 4
      %v1106 = vshll.u32 %v1074, 16
      %v1108 = vrot.slane %v1106, 5
      %v1109 = vor.u32 %v1105, %v1108
      %v1110 = vrot.slane %v1109, 4
      %v1112 = vshll.u32 %v1075, 16
      %v1114 = vrot.slane %v1112, 5
      %v1115 = vsel %vm367, %v1110, %v1114
      %v1117 = vshrl.u32 %v1076, 16
      %v1119 = vrot.slane %v1117, 4
      %v1120 = vshll.u32 %v1076, 16
      %v1122 = vrot.slane %v1120, 5
      %v1123 = vor.u32 %v1119, %v1122
      %v1124 = vrot.slane %v1123, 4
      %v1126 = vshll.u32 %v1077, 16
      %v1128 = vrot.slane %v1126, 5
      %v1129 = vsel %vm367, %v1124, %v1128
      %v1131 = vshrl.u32 %v1078, 16
      %v1133 = vrot.slane %v1131, 4
      %v1134 = vshll.u32 %v1078, 16
      %v1136 = vrot.slane %v1134, 5
      %v1137 = vor.u32 %v1133, %v1136
      %v1138 = vrot.slane %v1137, 4
      %v1140 = vshll.u32 %v1079, 16
      %v1142 = vrot.slane %v1140, 5
      %v1143 = vsel %vm367, %v1138, %v1142
      %v1145 = vshrl.u32 %v1080, 16
      %v1147 = vrot.slane %v1145, 4
      %v1148 = vshll.u32 %v1080, 16
      %v1150 = vrot.slane %v1148, 5
      %v1151 = vor.u32 %v1147, %v1150
      %v1152 = vrot.slane %v1151, 4
      %v1154 = vshll.u32 %v1081, 16
      %v1156 = vrot.slane %v1154, 5
      %v1157 = vsel %vm367, %v1152, %v1156
      %v1159 = vshrl.u32 %v1082, 16
      %v1161 = vrot.slane %v1159, 4
      %v1162 = vshll.u32 %v1082, 16
      %v1164 = vrot.slane %v1162, 5
      %v1165 = vor.u32 %v1161, %v1164
      %v1166 = vrot.slane %v1165, 4
      %v1168 = vshll.u32 %v1083, 16
      %v1170 = vrot.slane %v1168, 5
      %v1171 = vsel %vm367, %v1166, %v1170
      %v1173 = vshrl.u32 %v1084, 16
      %v1175 = vrot.slane %v1173, 4
      %v1176 = vshll.u32 %v1084, 16
      %v1178 = vrot.slane %v1176, 5
      %v1179 = vor.u32 %v1175, %v1178
      %v1180 = vrot.slane %v1179, 4
      %v1182 = vshll.u32 %v1085, 16
      %v1184 = vrot.slane %v1182, 5
      %v1185 = vsel %vm367, %v1180, %v1184
      %v1187 = vshrl.u32 %v1086, 16
      %v1189 = vrot.slane %v1187, 4
      %v1190 = vshll.u32 %v1086, 16
      %v1192 = vrot.slane %v1190, 5
      %v1193 = vor.u32 %v1189, %v1192
      %v1194 = vrot.slane %v1193, 4
      %v1196 = vshll.u32 %v1087, 16
      %v1198 = vrot.slane %v1196, 5
      %v1199 = vsel %vm367, %v1194, %v1198
      %s1200 = scalar_lea.vmem %s1, 16
      %v1201 = vld [vmem:[%s1200] sm:$0x3]
      %v1202 = vunpack.c.l.b16 %v1101
      %v1203 = vunpack.c.l.b16 %v1115
      %v1204 = vunpack.c.l.b16 %v1129
      %v1205 = vunpack.c.l.b16 %v1143
      %v1206 = vunpack.c.l.b16 %v1157
      %v1207 = vunpack.c.l.b16 %v1171
      %v1208 = vunpack.c.l.b16 %v1185
      %v1209 = vunpack.c.l.b16 %v1199
      %v1210 = vpack.c.b16 %v1203, %v1202
      %v1211 = vpack.c.b16 %v1205, %v1204
      %v1212 = vpack.c.b16 %v1207, %v1206
      %v1213 = vpack.c.b16 %v1209, %v1208
      %v1215 = vsel %vm239, %v1210, 0
      %v1218 = vsel %vm239, %v1211, 0
      %v1221 = vsel %vm239, %v1212, 0
      %v1224 = vsel %vm239, %v1213, 0
      %v1227 = vsel %vm252, %v1201, 0
      %1229 = vmatpush.bf16.msra.mxu0 0
      %1230 = vmatpush.bf16.msra.mxu0 0
      %1231 = vmatpush.bf16.msra.mxu0 0
      %1232 = vmatpush.bf16.msra.mxu0 0
      %1233 = vmatpush.bf16.msra.mxu0 0
      %1234 = vmatpush.bf16.msra.mxu0 0
      %1235 = vmatpush.bf16.msra.mxu0 0
      %1236 = vmatpush.bf16.msra.mxu0 %v1227
      %1237 = vmatmul.bf16.gmra.mxu0 %v1215
      %v1238 = vpop.f32.mrf.mxu0
      %v1239 = vadd.f32 0.0, %v1238
      %v1240 = vpop.f32.mrf.mxu0
      %v1241 = vadd.f32 0.0, %v1240
      %1242 = vmatmul.bf16.gmra.mxu0 %v1218
      %v1243 = vpop.f32.mrf.mxu0
      %v1244 = vadd.f32 0.0, %v1243
      %v1245 = vpop.f32.mrf.mxu0
      %v1246 = vadd.f32 0.0, %v1245
      %1247 = vmatmul.bf16.gmra.mxu0 %v1221
      %v1248 = vpop.f32.mrf.mxu0
      %v1249 = vadd.f32 0.0, %v1248
      %v1250 = vpop.f32.mrf.mxu0
      %v1251 = vadd.f32 0.0, %v1250
      %1252 = vmatmul.bf16.gmra.mxu0 %v1224
      %v1253 = vpop.f32.mrf.mxu0
      %v1254 = vadd.f32 0.0, %v1253
      %v1255 = vpop.f32.mrf.mxu0
      %v1256 = vadd.f32 0.0, %v1255
      %1257 = vdwg.mxu0
      %v1258 = vadd.f32 %v1064, %v1239
      %v1259 = vadd.f32 %v1065, %v1241
      %v1260 = vadd.f32 %v1066, %v1244
      %v1261 = vadd.f32 %v1067, %v1246
      %v1262 = vadd.f32 %v1068, %v1249
      %v1263 = vadd.f32 %v1069, %v1251
      %v1264 = vadd.f32 %v1070, %v1254
      %v1265 = vadd.f32 %v1071, %v1256
      %v1266 = vld [vmem:[%s2] sm:$0x1]
      %v1268 = vperm.slane %v1266, 0
      %v1270 = vadd.f32 %v1258, %v1268
      %v1271 = vadd.f32 %v1259, %v1268
      %v1272 = vadd.f32 %v1260, %v1268
      %v1273 = vadd.f32 %v1261, %v1268
      %v1274 = vadd.f32 %v1262, %v1268
      %v1275 = vadd.f32 %v1263, %v1268
      %v1276 = vadd.f32 %v1264, %v1268
      %v1277 = vadd.f32 %v1265, %v1268
      %vm1278 = vcmp.gt.f32.partialorder %v1270, 0.0
      %vm1279 = vcmp.gt.f32.partialorder %v1271, 0.0
      %vm1280 = vcmp.gt.f32.partialorder %v1272, 0.0
      %vm1281 = vcmp.gt.f32.partialorder %v1273, 0.0
      %vm1282 = vcmp.gt.f32.partialorder %v1274, 0.0
      %vm1283 = vcmp.gt.f32.partialorder %v1275, 0.0
      %vm1284 = vcmp.gt.f32.partialorder %v1276, 0.0
      %vm1285 = vcmp.gt.f32.partialorder %v1277, 0.0
      %v1286 = vld [vmem:[%s3] sm:$0x1]
      %v1288 = vperm.slane %v1286, 0
      %v1290 = vmul.f32 %v1288, %v1270
      %v1291 = vmul.f32 %v1288, %v1271
      %v1292 = vmul.f32 %v1288, %v1272
      %v1293 = vmul.f32 %v1288, %v1273
      %v1294 = vmul.f32 %v1288, %v1274
      %v1295 = vmul.f32 %v1288, %v1275
      %v1296 = vmul.f32 %v1288, %v1276
      %v1297 = vmul.f32 %v1288, %v1277
      %v1298 = vsel %vm1278, %v1270, %v1290
      %v1299 = vsel %vm1279, %v1271, %v1291
      %v1300 = vsel %vm1280, %v1272, %v1292
      %v1301 = vsel %vm1281, %v1273, %v1293
      %v1302 = vsel %vm1282, %v1274, %v1294
      %v1303 = vsel %vm1283, %v1275, %v1295
      %v1304 = vsel %vm1284, %v1276, %v1296
      %v1305 = vsel %vm1285, %v1277, %v1297
      %vm1306 = vcmask 64512
      %1307 = vst.msk [vmem:[%s197] sm:$0xff] %vm1306, %v1298
      %1308 = vst.msk [vmem:[%s197 + $0x8] sm:$0xff] %vm1306, %v1299
      %1309 = vst.msk [vmem:[%s197 + $0x10] sm:$0xff] %vm1306, %v1300
      %1310 = vst.msk [vmem:[%s197 + $0x18] sm:$0xff] %vm1306, %v1301
      %1311 = vst.msk [vmem:[%s197 + $0x20] sm:$0xff] %vm1306, %v1302
      %1312 = vst.msk [vmem:[%s197 + $0x28] sm:$0xff] %vm1306, %v1303
      %1313 = vst.msk [vmem:[%s197 + $0x30] sm:$0xff] %vm1306, %v1304
      %1314 = vst.msk [vmem:[%s197 + $0x38] sm:$0xff] %vm1306, %v1305
      %p1315 = scmp.lt.s32.totalorder %s15, 1
      %s1316 = scalar_select %p1315, %s15, 1
      %s1317 = smul.addr %s1316, 8
      %s1318 = smul.addr %s1317, 8
      %s1319 = scalar_lea.vmem %s4, %s1318
      // Predicated region
      $region37: #{tpu_custom_call.1} parent=35 // pred_check
        %p1320 = pneg %p122
      $region38: #{tpu_custom_call.1} parent=35 // pred_check_branch
        %1322 = sbr.rel (%p1320) target = $region40
      $region39: #{tpu_custom_call.1} parent=35 // pred_region
        _
      $region40: #{tpu_custom_call.1} parent=35 // pred_fallthru
        _
    $region36: #{tpu_custom_call.1} parent=5 // pred_fallthru
      _
    %p1323 = scmp.le.s32.totalorder 2, %s10
    // Predicated region
    $region41: #{tpu_custom_call.1} parent=5 // pred_check
      %p1324 = pneg %p1323
    $region42: #{tpu_custom_call.1} parent=5 // pred_check_branch
      %1326 = sbr.rel (%p1324) target = $region44
    $region43: #{tpu_custom_call.1} parent=5 // pred_region
      %s1327 = ssub.s32 %s10, 2
      // Predicated region
      $region45: #{tpu_custom_call.1} parent=43 // pred_check
        %p1328 = pneg %p128
      $region46: #{tpu_custom_call.1} parent=43 // pred_check_branch
        %1330 = sbr.rel (%p1328) target = $region48
      $region47: #{tpu_custom_call.1} parent=43 // pred_region
        %p1331 = scmp.lt.s32.totalorder %s16, 1
        %s1332 = scalar_select %p1331, %s16, 1
        %s1333 = smul.addr %s1332, 8
        %s1334 = smul.addr %s1333, 8
        %s1335 = scalar_lea.vmem %s4, %s1334
      $region48: #{tpu_custom_call.1} parent=43 // pred_fallthru
        _
    $region44: #{tpu_custom_call.1} parent=5 // pred_fallthru
      _
  $region6: #{tpu_custom_call.1} parent=0 // loop_footer
    %s14 = sadd.s32 1, %s10
  $region7: #{tpu_custom_call.1} parent=0 // loop_footer_branch
    %9 = sbr.rel target = $region3
  $region8: #{tpu_custom_call.1} parent=0 // loop_exit
    _

</llo_original>
